<compile_context>
chip_gen: v5e
topology: v5e:2x2
jax: 0.10.0
libtpu: 0.0.40
codegen_flags: <defaults>
</compile_context>

<pallas_src>
import jax
import jax.numpy as jnp
from jax.experimental import pallas as pl
from jax.experimental.pallas import tpu as pltpu


# Row offsets inside the packed fc-weight slab (all multiples of 8 so every
# in-kernel slice starts on a sublane boundary).
_W1_SEG = (0, 112, 224)   # three (108, 64) segments of w1^T
_B1_ROW = 336             # (1, 64)
_W2_ROWS = 344            # (8, 64): w2 rows (output j on sublanes, input k on lanes)
_B2_ROWS = 352            # (8, 1) at lane 0
_W3_ROWS = 360            # (8, 1) at lane 0
_FCW_ROWS = 368


def dsmodel0_kernel(sm_ref, t_ref, fcw_ref, out_ref):
    # Scalars live in SMEM: 16 conv taps, conv bias, fc3 bias.
    # Splat the taps to vector values ONCE (JAX does not CSE broadcast_in_dim).
    wv = [jnp.full((3, 108), sm_ref[k], jnp.float32) for k in range(16)]
    b_conv = sm_ref[16]
    b3 = sm_ref[17]

    # Fused conv(4x4) + bias + ReLU + maxpool(4x4).
    # (u,v)-outer: each of the 49 distinct slabs T[u//4, u%4, v] = img[4p+u, 4q+v]
    # is loaded exactly once (aligned (3,108) tile), accumulated into the 16
    # pooled-candidate accumulators acc[di][dj]; running max + bias + ReLU at the end.
    acc = [[None] * 4 for _ in range(4)]
    for u in range(7):
        for v in range(7):
            s = t_ref[u // 4, u % 4, v]                     # (3,108), fully aligned
            for a in range(max(0, u - 3), min(3, u) + 1):
                di = u - a
                for b in range(max(0, v - 3), min(3, v) + 1):
                    dj = v - b
                    term = wv[a * 4 + b] * s
                    acc[di][dj] = term if acc[di][dj] is None else acc[di][dj] + term

    pooled = acc[0][0]
    for di in range(4):
        for dj in range(4):
            if di == 0 and dj == 0:
                continue
            pooled = jnp.maximum(pooled, acc[di][dj])
    pooled = jnp.maximum(pooled + b_conv, 0.0)              # (3, 108); relu(max)==max(relu)

    # fc1 + ReLU: (1,324)@(324,64) as three INDEPENDENT lane-dense (1,108)@(108,64)
    # MXU passes (no serialized accumulate chain), summed with b1.
    d0 = jnp.dot(pooled[0:1, :], fcw_ref[_W1_SEG[0]:_W1_SEG[0] + 108, :],
                 preferred_element_type=jnp.float32)
    d1 = jnp.dot(pooled[1:2, :], fcw_ref[_W1_SEG[1]:_W1_SEG[1] + 108, :],
                 preferred_element_type=jnp.float32)
    d2 = jnp.dot(pooled[2:3, :], fcw_ref[_W1_SEG[2]:_W1_SEG[2] + 108, :],
                 preferred_element_type=jnp.float32)
    h1 = jnp.maximum(fcw_ref[_B1_ROW:_B1_ROW + 1, :] + (d0 + d1) + d2, 0.0)   # (1, 64)

    # fc2 + ReLU on the VPU/XLU (w2 is only 8x64 -> MXU pass would be 87% zeros):
    # broadcast h1 across 8 sublanes, multiply, lane-reduce, add b2.
    w2r = fcw_ref[_W2_ROWS:_W2_ROWS + 8, :]                 # (8, 64)
    b2c = fcw_ref[_B2_ROWS:_B2_ROWS + 8, 0:1]               # (8, 1)
    h2 = jnp.maximum(jnp.sum(h1 * w2r, axis=1, keepdims=True) + b2c, 0.0)     # (8, 1)

    # fc3 + ReLU: multiply + sublane reduce.
    w3c = fcw_ref[_W3_ROWS:_W3_ROWS + 8, 0:1]               # (8, 1)
    h3 = jnp.sum(h2 * w3c, axis=0, keepdims=True) + b3      # (1, 1)
    out_ref[...] = jnp.maximum(h3, 0.0)


def _rearrange_image(img):
    """img (18,436) -> T (2,4,8,3,108) with T[h,u,v,p,q] = img[4p + u + 4h, 4q + v].

    Built from contiguous slices + reshapes + one stack/transpose only (no
    stride-4 lane gathers), so per-call wrapper cost is a couple of tiny fused
    copies.  The h=1 copy pre-shifts rows by 4 so in-kernel slab reads for
    u>=4 start at sublane 0 (no misaligned slices / sublane rolls in the hot loop).
    """
    img16 = img[:16, :]                                      # rows >= 16 never used
    lo = img16[:, 0:432].reshape(16, 108, 4)                 # [r, q, v]   v in 0..3
    hi = img16[:, 4:436].reshape(16, 108, 4)                 # [r, q, v-4] v in 4..7
    cph = jnp.concatenate([lo, hi], axis=-1)                 # (16,108,8): img[r, 4q+v]
    a = cph[0:12].reshape(3, 4, 108, 8)                      # [p, u, q, v] = img[4p+u,   4q+v]
    b = cph[4:16].reshape(3, 4, 108, 8)                      # [p, u, q, v] = img[4p+u+4, 4q+v]
    t = jnp.stack([a, b], axis=0)                            # (2,3,4,108,8): [h,p,u,q,v]
    return t.transpose(0, 2, 4, 1, 3)                        # (2,4,8,3,108): [h,u,v,p,q]


def pack_params(params):
    """One-time packing of all weights/biases (call once at parameter-load time,
    NOT inside the per-call forward)."""
    (w_conv, b_conv, w1, b1, w2, b2, w3, b3) = params
    fcw = jnp.zeros((_FCW_ROWS, 64), jnp.float32)
    w1t = w1.T.astype(jnp.float32)                           # (324, 64)
    for p, off in enumerate(_W1_SEG):
        fcw = fcw.at[off:off + 108, :].set(w1t[p * 108:(p + 1) * 108, :])
    fcw = fcw.at[_B1_ROW, :].set(b1.astype(jnp.float32))
    fcw = fcw.at[_W2_ROWS:_W2_ROWS + 8, :].set(w2.astype(jnp.float32))
    fcw = fcw.at[_B2_ROWS:_B2_ROWS + 8, 0].set(b2.astype(jnp.float32))
    fcw = fcw.at[_W3_ROWS:_W3_ROWS + 8, 0].set(w3.reshape(8).astype(jnp.float32))
    scal = jnp.concatenate([w_conv.reshape(16).astype(jnp.float32),
                            b_conv.reshape(1).astype(jnp.float32),
                            b3.reshape(1).astype(jnp.float32)])   # (18,) -> SMEM
    return scal, fcw


@jax.jit
def dsmodel0_forward(x, scal, fcw):
    """Per-call path: only the cheap image rearrangement + the fused kernel."""
    img = x.reshape(18, 436).astype(jnp.float32)             # x.reshape(1,1,18,436)
    t = _rearrange_image(img)                                 # (2,4,8,3,108) ~83 KB

    out = pl.pallas_call(
        dsmodel0_kernel,
        out_shape=jax.ShapeDtypeStruct((1, 1), jnp.float32),
        in_specs=[
            pl.BlockSpec(memory_space=pltpu.MemorySpace.SMEM),   # scalars
            pl.BlockSpec(memory_space=pltpu.MemorySpace.VMEM),   # image slab tensor
            pl.BlockSpec(memory_space=pltpu.MemorySpace.VMEM),   # packed fc weights
        ],
        out_specs=pl.BlockSpec(memory_space=pltpu.MemorySpace.VMEM),
        cost_estimate=pl.CostEstimate(flops=250_000, transcendentals=0,
                                      bytes_accessed=180_000),
    )(scal, t, fcw)
    return out                                                # (1, 1)


def reference_forward(x, params):
    """Plain-JAX reference with the same semantics as the PyTorch module."""
    (w_conv, b_conv, w1, b1, w2, b2, w3, b3) = params
    img = x.reshape(18, 436).astype(jnp.float32)
    conv = jnp.full((15, 433), b_conv[0], jnp.float32)
    for a in range(4):
        for b in range(4):
            conv = conv + w_conv[a, b] * img[a:a + 15, b:b + 433]
    conv = jnp.maximum(conv, 0.0)
    pooled = conv[:12, :432].reshape(3, 4, 108, 4).max(axis=(1, 3))   # (3, 108)
    v = pooled.reshape(1, 324)
    h1 = jnp.maximum(v @ w1.T + b1, 0.0)
    h2 = jnp.maximum(h1 @ w2.T + b2, 0.0)
    h3 = jnp.maximum(h2 @ w3.T + b3, 0.0)
    return h3


if __name__ == "__main__":
    key = jax.random.PRNGKey(0)
    kx, kw, kb, k1, kb1, k2, kb2, k3, kb3 = jax.random.split(key, 9)

    # The module's forward hard-codes x.reshape(1, 1, 18, 436) -> 7848 elements.
    x = jax.random.normal(kx, (1, 1, 18, 436), jnp.float32)

    params = (
        0.1 * jax.random.normal(kw, (4, 4), jnp.float32),       # conv_1.weight (1,1,4,4) squeezed
        0.1 * jax.random.normal(kb, (1,), jnp.float32),          # conv_1.bias
        0.1 * jax.random.normal(k1, (64, 324), jnp.float32),     # fc1.weight
        0.1 * jax.random.normal(kb1, (64,), jnp.float32),        # fc1.bias
        0.1 * jax.random.normal(k2, (8, 64), jnp.float32),       # fc2.weight
        0.1 * jax.random.normal(kb2, (8,), jnp.float32),         # fc2.bias
        0.1 * jax.random.normal(k3, (1, 8), jnp.float32),        # fc3.weight
        0.1 * jax.random.normal(kb3, (1,), jnp.float32),         # fc3.bias
    )

    # One-time packing (hoisted out of the per-call path per perf review).
    scal, fcw = jax.block_until_ready(pack_params(params))

    out = jax.block_until_ready(dsmodel0_forward(x, scal, fcw))
    ref = reference_forward(x, params)
    assert out.shape == (1, 1), out.shape
    assert jnp.allclose(out, ref, atol=1e-4, rtol=1e-4), (out, ref)
    print("KERNEL_OK")
</pallas_src>

<mosaic_0001>
module attributes {stable_mosaic.version = 11 : i64} {
  func.func @dsmodel0_kernel(%arg0: memref<18xf32, #tpu.memory_space<smem>>, %arg1: memref<2x4x8x3x108xf32, #tpu.memory_space<vmem>>, %arg2: memref<368x64xf32, #tpu.memory_space<vmem>>, %arg3: memref<1x1xf32, #tpu.memory_space<vmem>>) attributes {dimension_semantics = [], scalar_prefetch = 0 : i64, scratch_operands = 0 : i64, tpu.core_type = #tpu.core_type<tc>} {
    %c0 = arith.constant 0 : index
    %0 = memref.load %arg0[%c0] : memref<18xf32, #tpu.memory_space<smem>>
    %1 = vector.broadcast %0 : f32 to vector<3x108xf32>
    %c1 = arith.constant 1 : index
    %2 = memref.load %arg0[%c1] : memref<18xf32, #tpu.memory_space<smem>>
    %3 = vector.broadcast %2 : f32 to vector<3x108xf32>
    %c2 = arith.constant 2 : index
    %4 = memref.load %arg0[%c2] : memref<18xf32, #tpu.memory_space<smem>>
    %5 = vector.broadcast %4 : f32 to vector<3x108xf32>
    %c3 = arith.constant 3 : index
    %6 = memref.load %arg0[%c3] : memref<18xf32, #tpu.memory_space<smem>>
    %7 = vector.broadcast %6 : f32 to vector<3x108xf32>
    %c4 = arith.constant 4 : index
    %8 = memref.load %arg0[%c4] : memref<18xf32, #tpu.memory_space<smem>>
    %9 = vector.broadcast %8 : f32 to vector<3x108xf32>
    %c5 = arith.constant 5 : index
    %10 = memref.load %arg0[%c5] : memref<18xf32, #tpu.memory_space<smem>>
    %11 = vector.broadcast %10 : f32 to vector<3x108xf32>
    %c6 = arith.constant 6 : index
    %12 = memref.load %arg0[%c6] : memref<18xf32, #tpu.memory_space<smem>>
    %13 = vector.broadcast %12 : f32 to vector<3x108xf32>
    %c7 = arith.constant 7 : index
    %14 = memref.load %arg0[%c7] : memref<18xf32, #tpu.memory_space<smem>>
    %15 = vector.broadcast %14 : f32 to vector<3x108xf32>
    %c8 = arith.constant 8 : index
    %16 = memref.load %arg0[%c8] : memref<18xf32, #tpu.memory_space<smem>>
    %17 = vector.broadcast %16 : f32 to vector<3x108xf32>
    %c9 = arith.constant 9 : index
    %18 = memref.load %arg0[%c9] : memref<18xf32, #tpu.memory_space<smem>>
    %19 = vector.broadcast %18 : f32 to vector<3x108xf32>
    %c10 = arith.constant 10 : index
    %20 = memref.load %arg0[%c10] : memref<18xf32, #tpu.memory_space<smem>>
    %21 = vector.broadcast %20 : f32 to vector<3x108xf32>
    %c11 = arith.constant 11 : index
    %22 = memref.load %arg0[%c11] : memref<18xf32, #tpu.memory_space<smem>>
    %23 = vector.broadcast %22 : f32 to vector<3x108xf32>
    %c12 = arith.constant 12 : index
    %24 = memref.load %arg0[%c12] : memref<18xf32, #tpu.memory_space<smem>>
    %25 = vector.broadcast %24 : f32 to vector<3x108xf32>
    %c13 = arith.constant 13 : index
    %26 = memref.load %arg0[%c13] : memref<18xf32, #tpu.memory_space<smem>>
    %27 = vector.broadcast %26 : f32 to vector<3x108xf32>
    %c14 = arith.constant 14 : index
    %28 = memref.load %arg0[%c14] : memref<18xf32, #tpu.memory_space<smem>>
    %29 = vector.broadcast %28 : f32 to vector<3x108xf32>
    %c15 = arith.constant 15 : index
    %30 = memref.load %arg0[%c15] : memref<18xf32, #tpu.memory_space<smem>>
    %31 = vector.broadcast %30 : f32 to vector<3x108xf32>
    %c16 = arith.constant 16 : index
    %32 = memref.load %arg0[%c16] : memref<18xf32, #tpu.memory_space<smem>>
    %c17 = arith.constant 17 : index
    %33 = memref.load %arg0[%c17] : memref<18xf32, #tpu.memory_space<smem>>
    %c0_0 = arith.constant 0 : index
    %c0_1 = arith.constant 0 : index
    %c0_2 = arith.constant 0 : index
    %c0_3 = arith.constant 0 : index
    %c0_4 = arith.constant 0 : index
    %34 = vector.load %arg1[%c0_0, %c0_1, %c0_2, %c0_3, %c0_4] : memref<2x4x8x3x108xf32, #tpu.memory_space<vmem>>, vector<1x1x1x3x108xf32>
    %35 = vector.shape_cast %34 : vector<1x1x1x3x108xf32> to vector<3x108xf32>
    %36 = arith.mulf %1, %35 : vector<3x108xf32>
    %c0_5 = arith.constant 0 : index
    %c0_6 = arith.constant 0 : index
    %c1_7 = arith.constant 1 : index
    %c0_8 = arith.constant 0 : index
    %c0_9 = arith.constant 0 : index
    %37 = vector.load %arg1[%c0_5, %c0_6, %c1_7, %c0_8, %c0_9] : memref<2x4x8x3x108xf32, #tpu.memory_space<vmem>>, vector<1x1x1x3x108xf32>
    %38 = vector.shape_cast %37 : vector<1x1x1x3x108xf32> to vector<3x108xf32>
    %39 = arith.mulf %1, %38 : vector<3x108xf32>
    %40 = arith.mulf %3, %38 : vector<3x108xf32>
    %41 = arith.addf %36, %40 : vector<3x108xf32>
    %c0_10 = arith.constant 0 : index
    %c0_11 = arith.constant 0 : index
    %c2_12 = arith.constant 2 : index
    %c0_13 = arith.constant 0 : index
    %c0_14 = arith.constant 0 : index
    %42 = vector.load %arg1[%c0_10, %c0_11, %c2_12, %c0_13, %c0_14] : memref<2x4x8x3x108xf32, #tpu.memory_space<vmem>>, vector<1x1x1x3x108xf32>
    %43 = vector.shape_cast %42 : vector<1x1x1x3x108xf32> to vector<3x108xf32>
    %44 = arith.mulf %1, %43 : vector<3x108xf32>
    %45 = arith.mulf %3, %43 : vector<3x108xf32>
    %46 = arith.addf %39, %45 : vector<3x108xf32>
    %47 = arith.mulf %5, %43 : vector<3x108xf32>
    %48 = arith.addf %41, %47 : vector<3x108xf32>
    %c0_15 = arith.constant 0 : index
    %c0_16 = arith.constant 0 : index
    %c3_17 = arith.constant 3 : index
    %c0_18 = arith.constant 0 : index
    %c0_19 = arith.constant 0 : index
    %49 = vector.load %arg1[%c0_15, %c0_16, %c3_17, %c0_18, %c0_19] : memref<2x4x8x3x108xf32, #tpu.memory_space<vmem>>, vector<1x1x1x3x108xf32>
    %50 = vector.shape_cast %49 : vector<1x1x1x3x108xf32> to vector<3x108xf32>
    %51 = arith.mulf %1, %50 : vector<3x108xf32>
    %52 = arith.mulf %3, %50 : vector<3x108xf32>
    %53 = arith.addf %44, %52 : vector<3x108xf32>
    %54 = arith.mulf %5, %50 : vector<3x108xf32>
    %55 = arith.addf %46, %54 : vector<3x108xf32>
    %56 = arith.mulf %7, %50 : vector<3x108xf32>
    %57 = arith.addf %48, %56 : vector<3x108xf32>
    %c0_20 = arith.constant 0 : index
    %c0_21 = arith.constant 0 : index
    %c4_22 = arith.constant 4 : index
    %c0_23 = arith.constant 0 : index
    %c0_24 = arith.constant 0 : index
    %58 = vector.load %arg1[%c0_20, %c0_21, %c4_22, %c0_23, %c0_24] : memref<2x4x8x3x108xf32, #tpu.memory_space<vmem>>, vector<1x1x1x3x108xf32>
    %59 = vector.shape_cast %58 : vector<1x1x1x3x108xf32> to vector<3x108xf32>
    %60 = arith.mulf %3, %59 : vector<3x108xf32>
    %61 = arith.addf %51, %60 : vector<3x108xf32>
    %62 = arith.mulf %5, %59 : vector<3x108xf32>
    %63 = arith.addf %53, %62 : vector<3x108xf32>
    %64 = arith.mulf %7, %59 : vector<3x108xf32>
    %65 = arith.addf %55, %64 : vector<3x108xf32>
    %c0_25 = arith.constant 0 : index
    %c0_26 = arith.constant 0 : index
    %c5_27 = arith.constant 5 : index
    %c0_28 = arith.constant 0 : index
    %c0_29 = arith.constant 0 : index
    %66 = vector.load %arg1[%c0_25, %c0_26, %c5_27, %c0_28, %c0_29] : memref<2x4x8x3x108xf32, #tpu.memory_space<vmem>>, vector<1x1x1x3x108xf32>
    %67 = vector.shape_cast %66 : vector<1x1x1x3x108xf32> to vector<3x108xf32>
    %68 = arith.mulf %5, %67 : vector<3x108xf32>
    %69 = arith.addf %61, %68 : vector<3x108xf32>
    %70 = arith.mulf %7, %67 : vector<3x108xf32>
    %71 = arith.addf %63, %70 : vector<3x108xf32>
    %c0_30 = arith.constant 0 : index
    %c0_31 = arith.constant 0 : index
    %c6_32 = arith.constant 6 : index
    %c0_33 = arith.constant 0 : index
    %c0_34 = arith.constant 0 : index
    %72 = vector.load %arg1[%c0_30, %c0_31, %c6_32, %c0_33, %c0_34] : memref<2x4x8x3x108xf32, #tpu.memory_space<vmem>>, vector<1x1x1x3x108xf32>
    %73 = vector.shape_cast %72 : vector<1x1x1x3x108xf32> to vector<3x108xf32>
    %74 = arith.mulf %7, %73 : vector<3x108xf32>
    %75 = arith.addf %69, %74 : vector<3x108xf32>
    %c0_35 = arith.constant 0 : index
    %c1_36 = arith.constant 1 : index
    %c0_37 = arith.constant 0 : index
    %c0_38 = arith.constant 0 : index
    %c0_39 = arith.constant 0 : index
    %76 = vector.load %arg1[%c0_35, %c1_36, %c0_37, %c0_38, %c0_39] : memref<2x4x8x3x108xf32, #tpu.memory_space<vmem>>, vector<1x1x1x3x108xf32>
    %77 = vector.shape_cast %76 : vector<1x1x1x3x108xf32> to vector<3x108xf32>
    %78 = arith.mulf %1, %77 : vector<3x108xf32>
    %79 = arith.mulf %9, %77 : vector<3x108xf32>
    %80 = arith.addf %57, %79 : vector<3x108xf32>
    %c0_40 = arith.constant 0 : index
    %c1_41 = arith.constant 1 : index
    %c1_42 = arith.constant 1 : index
    %c0_43 = arith.constant 0 : index
    %c0_44 = arith.constant 0 : index
    %81 = vector.load %arg1[%c0_40, %c1_41, %c1_42, %c0_43, %c0_44] : memref<2x4x8x3x108xf32, #tpu.memory_space<vmem>>, vector<1x1x1x3x108xf32>
    %82 = vector.shape_cast %81 : vector<1x1x1x3x108xf32> to vector<3x108xf32>
    %83 = arith.mulf %1, %82 : vector<3x108xf32>
    %84 = arith.mulf %3, %82 : vector<3x108xf32>
    %85 = arith.addf %78, %84 : vector<3x108xf32>
    %86 = arith.mulf %9, %82 : vector<3x108xf32>
    %87 = arith.addf %65, %86 : vector<3x108xf32>
    %88 = arith.mulf %11, %82 : vector<3x108xf32>
    %89 = arith.addf %80, %88 : vector<3x108xf32>
    %c0_45 = arith.constant 0 : index
    %c1_46 = arith.constant 1 : index
    %c2_47 = arith.constant 2 : index
    %c0_48 = arith.constant 0 : index
    %c0_49 = arith.constant 0 : index
    %90 = vector.load %arg1[%c0_45, %c1_46, %c2_47, %c0_48, %c0_49] : memref<2x4x8x3x108xf32, #tpu.memory_space<vmem>>, vector<1x1x1x3x108xf32>
    %91 = vector.shape_cast %90 : vector<1x1x1x3x108xf32> to vector<3x108xf32>
    %92 = arith.mulf %1, %91 : vector<3x108xf32>
    %93 = arith.mulf %3, %91 : vector<3x108xf32>
    %94 = arith.addf %83, %93 : vector<3x108xf32>
    %95 = arith.mulf %5, %91 : vector<3x108xf32>
    %96 = arith.addf %85, %95 : vector<3x108xf32>
    %97 = arith.mulf %9, %91 : vector<3x108xf32>
    %98 = arith.addf %71, %97 : vector<3x108xf32>
    %99 = arith.mulf %11, %91 : vector<3x108xf32>
    %100 = arith.addf %87, %99 : vector<3x108xf32>
    %101 = arith.mulf %13, %91 : vector<3x108xf32>
    %102 = arith.addf %89, %101 : vector<3x108xf32>
    %c0_50 = arith.constant 0 : index
    %c1_51 = arith.constant 1 : index
    %c3_52 = arith.constant 3 : index
    %c0_53 = arith.constant 0 : index
    %c0_54 = arith.constant 0 : index
    %103 = vector.load %arg1[%c0_50, %c1_51, %c3_52, %c0_53, %c0_54] : memref<2x4x8x3x108xf32, #tpu.memory_space<vmem>>, vector<1x1x1x3x108xf32>
    %104 = vector.shape_cast %103 : vector<1x1x1x3x108xf32> to vector<3x108xf32>
    %105 = arith.mulf %1, %104 : vector<3x108xf32>
    %106 = arith.mulf %3, %104 : vector<3x108xf32>
    %107 = arith.addf %92, %106 : vector<3x108xf32>
    %108 = arith.mulf %5, %104 : vector<3x108xf32>
    %109 = arith.addf %94, %108 : vector<3x108xf32>
    %110 = arith.mulf %7, %104 : vector<3x108xf32>
    %111 = arith.addf %96, %110 : vector<3x108xf32>
    %112 = arith.mulf %9, %104 : vector<3x108xf32>
    %113 = arith.addf %75, %112 : vector<3x108xf32>
    %114 = arith.mulf %11, %104 : vector<3x108xf32>
    %115 = arith.addf %98, %114 : vector<3x108xf32>
    %116 = arith.mulf %13, %104 : vector<3x108xf32>
    %117 = arith.addf %100, %116 : vector<3x108xf32>
    %118 = arith.mulf %15, %104 : vector<3x108xf32>
    %119 = arith.addf %102, %118 : vector<3x108xf32>
    %c0_55 = arith.constant 0 : index
    %c1_56 = arith.constant 1 : index
    %c4_57 = arith.constant 4 : index
    %c0_58 = arith.constant 0 : index
    %c0_59 = arith.constant 0 : index
    %120 = vector.load %arg1[%c0_55, %c1_56, %c4_57, %c0_58, %c0_59] : memref<2x4x8x3x108xf32, #tpu.memory_space<vmem>>, vector<1x1x1x3x108xf32>
    %121 = vector.shape_cast %120 : vector<1x1x1x3x108xf32> to vector<3x108xf32>
    %122 = arith.mulf %3, %121 : vector<3x108xf32>
    %123 = arith.addf %105, %122 : vector<3x108xf32>
    %124 = arith.mulf %5, %121 : vector<3x108xf32>
    %125 = arith.addf %107, %124 : vector<3x108xf32>
    %126 = arith.mulf %7, %121 : vector<3x108xf32>
    %127 = arith.addf %109, %126 : vector<3x108xf32>
    %128 = arith.mulf %11, %121 : vector<3x108xf32>
    %129 = arith.addf %113, %128 : vector<3x108xf32>
    %130 = arith.mulf %13, %121 : vector<3x108xf32>
    %131 = arith.addf %115, %130 : vector<3x108xf32>
    %132 = arith.mulf %15, %121 : vector<3x108xf32>
    %133 = arith.addf %117, %132 : vector<3x108xf32>
    %c0_60 = arith.constant 0 : index
    %c1_61 = arith.constant 1 : index
    %c5_62 = arith.constant 5 : index
    %c0_63 = arith.constant 0 : index
    %c0_64 = arith.constant 0 : index
    %134 = vector.load %arg1[%c0_60, %c1_61, %c5_62, %c0_63, %c0_64] : memref<2x4x8x3x108xf32, #tpu.memory_space<vmem>>, vector<1x1x1x3x108xf32>
    %135 = vector.shape_cast %134 : vector<1x1x1x3x108xf32> to vector<3x108xf32>
    %136 = arith.mulf %5, %135 : vector<3x108xf32>
    %137 = arith.addf %123, %136 : vector<3x108xf32>
    %138 = arith.mulf %7, %135 : vector<3x108xf32>
    %139 = arith.addf %125, %138 : vector<3x108xf32>
    %140 = arith.mulf %13, %135 : vector<3x108xf32>
    %141 = arith.addf %129, %140 : vector<3x108xf32>
    %142 = arith.mulf %15, %135 : vector<3x108xf32>
    %143 = arith.addf %131, %142 : vector<3x108xf32>
    %c0_65 = arith.constant 0 : index
    %c1_66 = arith.constant 1 : index
    %c6_67 = arith.constant 6 : index
    %c0_68 = arith.constant 0 : index
    %c0_69 = arith.constant 0 : index
    %144 = vector.load %arg1[%c0_65, %c1_66, %c6_67, %c0_68, %c0_69] : memref<2x4x8x3x108xf32, #tpu.memory_space<vmem>>, vector<1x1x1x3x108xf32>
    %145 = vector.shape_cast %144 : vector<1x1x1x3x108xf32> to vector<3x108xf32>
    %146 = arith.mulf %7, %145 : vector<3x108xf32>
    %147 = arith.addf %137, %146 : vector<3x108xf32>
    %148 = arith.mulf %15, %145 : vector<3x108xf32>
    %149 = arith.addf %141, %148 : vector<3x108xf32>
    %c0_70 = arith.constant 0 : index
    %c2_71 = arith.constant 2 : index
    %c0_72 = arith.constant 0 : index
    %c0_73 = arith.constant 0 : index
    %c0_74 = arith.constant 0 : index
    %150 = vector.load %arg1[%c0_70, %c2_71, %c0_72, %c0_73, %c0_74] : memref<2x4x8x3x108xf32, #tpu.memory_space<vmem>>, vector<1x1x1x3x108xf32>
    %151 = vector.shape_cast %150 : vector<1x1x1x3x108xf32> to vector<3x108xf32>
    %152 = arith.mulf %1, %151 : vector<3x108xf32>
    %153 = arith.mulf %9, %151 : vector<3x108xf32>
    %154 = arith.addf %111, %153 : vector<3x108xf32>
    %155 = arith.mulf %17, %151 : vector<3x108xf32>
    %156 = arith.addf %119, %155 : vector<3x108xf32>
    %c0_75 = arith.constant 0 : index
    %c2_76 = arith.constant 2 : index
    %c1_77 = arith.constant 1 : index
    %c0_78 = arith.constant 0 : index
    %c0_79 = arith.constant 0 : index
    %157 = vector.load %arg1[%c0_75, %c2_76, %c1_77, %c0_78, %c0_79] : memref<2x4x8x3x108xf32, #tpu.memory_space<vmem>>, vector<1x1x1x3x108xf32>
    %158 = vector.shape_cast %157 : vector<1x1x1x3x108xf32> to vector<3x108xf32>
    %159 = arith.mulf %1, %158 : vector<3x108xf32>
    %160 = arith.mulf %3, %158 : vector<3x108xf32>
    %161 = arith.addf %152, %160 : vector<3x108xf32>
    %162 = arith.mulf %9, %158 : vector<3x108xf32>
    %163 = arith.addf %127, %162 : vector<3x108xf32>
    %164 = arith.mulf %11, %158 : vector<3x108xf32>
    %165 = arith.addf %154, %164 : vector<3x108xf32>
    %166 = arith.mulf %17, %158 : vector<3x108xf32>
    %167 = arith.addf %133, %166 : vector<3x108xf32>
    %168 = arith.mulf %19, %158 : vector<3x108xf32>
    %169 = arith.addf %156, %168 : vector<3x108xf32>
    %c0_80 = arith.constant 0 : index
    %c2_81 = arith.constant 2 : index
    %c2_82 = arith.constant 2 : index
    %c0_83 = arith.constant 0 : index
    %c0_84 = arith.constant 0 : index
    %170 = vector.load %arg1[%c0_80, %c2_81, %c2_82, %c0_83, %c0_84] : memref<2x4x8x3x108xf32, #tpu.memory_space<vmem>>, vector<1x1x1x3x108xf32>
    %171 = vector.shape_cast %170 : vector<1x1x1x3x108xf32> to vector<3x108xf32>
    %172 = arith.mulf %1, %171 : vector<3x108xf32>
    %173 = arith.mulf %3, %171 : vector<3x108xf32>
    %174 = arith.addf %159, %173 : vector<3x108xf32>
    %175 = arith.mulf %5, %171 : vector<3x108xf32>
    %176 = arith.addf %161, %175 : vector<3x108xf32>
    %177 = arith.mulf %9, %171 : vector<3x108xf32>
    %178 = arith.addf %139, %177 : vector<3x108xf32>
    %179 = arith.mulf %11, %171 : vector<3x108xf32>
    %180 = arith.addf %163, %179 : vector<3x108xf32>
    %181 = arith.mulf %13, %171 : vector<3x108xf32>
    %182 = arith.addf %165, %181 : vector<3x108xf32>
    %183 = arith.mulf %17, %171 : vector<3x108xf32>
    %184 = arith.addf %143, %183 : vector<3x108xf32>
    %185 = arith.mulf %19, %171 : vector<3x108xf32>
    %186 = arith.addf %167, %185 : vector<3x108xf32>
    %187 = arith.mulf %21, %171 : vector<3x108xf32>
    %188 = arith.addf %169, %187 : vector<3x108xf32>
    %c0_85 = arith.constant 0 : index
    %c2_86 = arith.constant 2 : index
    %c3_87 = arith.constant 3 : index
    %c0_88 = arith.constant 0 : index
    %c0_89 = arith.constant 0 : index
    %189 = vector.load %arg1[%c0_85, %c2_86, %c3_87, %c0_88, %c0_89] : memref<2x4x8x3x108xf32, #tpu.memory_space<vmem>>, vector<1x1x1x3x108xf32>
    %190 = vector.shape_cast %189 : vector<1x1x1x3x108xf32> to vector<3x108xf32>
    %191 = arith.mulf %1, %190 : vector<3x108xf32>
    %192 = arith.mulf %3, %190 : vector<3x108xf32>
    %193 = arith.addf %172, %192 : vector<3x108xf32>
    %194 = arith.mulf %5, %190 : vector<3x108xf32>
    %195 = arith.addf %174, %194 : vector<3x108xf32>
    %196 = arith.mulf %7, %190 : vector<3x108xf32>
    %197 = arith.addf %176, %196 : vector<3x108xf32>
    %198 = arith.mulf %9, %190 : vector<3x108xf32>
    %199 = arith.addf %147, %198 : vector<3x108xf32>
    %200 = arith.mulf %11, %190 : vector<3x108xf32>
    %201 = arith.addf %178, %200 : vector<3x108xf32>
    %202 = arith.mulf %13, %190 : vector<3x108xf32>
    %203 = arith.addf %180, %202 : vector<3x108xf32>
    %204 = arith.mulf %15, %190 : vector<3x108xf32>
    %205 = arith.addf %182, %204 : vector<3x108xf32>
    %206 = arith.mulf %17, %190 : vector<3x108xf32>
    %207 = arith.addf %149, %206 : vector<3x108xf32>
    %208 = arith.mulf %19, %190 : vector<3x108xf32>
    %209 = arith.addf %184, %208 : vector<3x108xf32>
    %210 = arith.mulf %21, %190 : vector<3x108xf32>
    %211 = arith.addf %186, %210 : vector<3x108xf32>
    %212 = arith.mulf %23, %190 : vector<3x108xf32>
    %213 = arith.addf %188, %212 : vector<3x108xf32>
    %c0_90 = arith.constant 0 : index
    %c2_91 = arith.constant 2 : index
    %c4_92 = arith.constant 4 : index
    %c0_93 = arith.constant 0 : index
    %c0_94 = arith.constant 0 : index
    %214 = vector.load %arg1[%c0_90, %c2_91, %c4_92, %c0_93, %c0_94] : memref<2x4x8x3x108xf32, #tpu.memory_space<vmem>>, vector<1x1x1x3x108xf32>
    %215 = vector.shape_cast %214 : vector<1x1x1x3x108xf32> to vector<3x108xf32>
    %216 = arith.mulf %3, %215 : vector<3x108xf32>
    %217 = arith.addf %191, %216 : vector<3x108xf32>
    %218 = arith.mulf %5, %215 : vector<3x108xf32>
    %219 = arith.addf %193, %218 : vector<3x108xf32>
    %220 = arith.mulf %7, %215 : vector<3x108xf32>
    %221 = arith.addf %195, %220 : vector<3x108xf32>
    %222 = arith.mulf %11, %215 : vector<3x108xf32>
    %223 = arith.addf %199, %222 : vector<3x108xf32>
    %224 = arith.mulf %13, %215 : vector<3x108xf32>
    %225 = arith.addf %201, %224 : vector<3x108xf32>
    %226 = arith.mulf %15, %215 : vector<3x108xf32>
    %227 = arith.addf %203, %226 : vector<3x108xf32>
    %228 = arith.mulf %19, %215 : vector<3x108xf32>
    %229 = arith.addf %207, %228 : vector<3x108xf32>
    %230 = arith.mulf %21, %215 : vector<3x108xf32>
    %231 = arith.addf %209, %230 : vector<3x108xf32>
    %232 = arith.mulf %23, %215 : vector<3x108xf32>
    %233 = arith.addf %211, %232 : vector<3x108xf32>
    %c0_95 = arith.constant 0 : index
    %c2_96 = arith.constant 2 : index
    %c5_97 = arith.constant 5 : index
    %c0_98 = arith.constant 0 : index
    %c0_99 = arith.constant 0 : index
    %234 = vector.load %arg1[%c0_95, %c2_96, %c5_97, %c0_98, %c0_99] : memref<2x4x8x3x108xf32, #tpu.memory_space<vmem>>, vector<1x1x1x3x108xf32>
    %235 = vector.shape_cast %234 : vector<1x1x1x3x108xf32> to vector<3x108xf32>
    %236 = arith.mulf %5, %235 : vector<3x108xf32>
    %237 = arith.addf %217, %236 : vector<3x108xf32>
    %238 = arith.mulf %7, %235 : vector<3x108xf32>
    %239 = arith.addf %219, %238 : vector<3x108xf32>
    %240 = arith.mulf %13, %235 : vector<3x108xf32>
    %241 = arith.addf %223, %240 : vector<3x108xf32>
    %242 = arith.mulf %15, %235 : vector<3x108xf32>
    %243 = arith.addf %225, %242 : vector<3x108xf32>
    %244 = arith.mulf %21, %235 : vector<3x108xf32>
    %245 = arith.addf %229, %244 : vector<3x108xf32>
    %246 = arith.mulf %23, %235 : vector<3x108xf32>
    %247 = arith.addf %231, %246 : vector<3x108xf32>
    %c0_100 = arith.constant 0 : index
    %c2_101 = arith.constant 2 : index
    %c6_102 = arith.constant 6 : index
    %c0_103 = arith.constant 0 : index
    %c0_104 = arith.constant 0 : index
    %248 = vector.load %arg1[%c0_100, %c2_101, %c6_102, %c0_103, %c0_104] : memref<2x4x8x3x108xf32, #tpu.memory_space<vmem>>, vector<1x1x1x3x108xf32>
    %249 = vector.shape_cast %248 : vector<1x1x1x3x108xf32> to vector<3x108xf32>
    %250 = arith.mulf %7, %249 : vector<3x108xf32>
    %251 = arith.addf %237, %250 : vector<3x108xf32>
    %252 = arith.mulf %15, %249 : vector<3x108xf32>
    %253 = arith.addf %241, %252 : vector<3x108xf32>
    %254 = arith.mulf %23, %249 : vector<3x108xf32>
    %255 = arith.addf %245, %254 : vector<3x108xf32>
    %c0_105 = arith.constant 0 : index
    %c3_106 = arith.constant 3 : index
    %c0_107 = arith.constant 0 : index
    %c0_108 = arith.constant 0 : index
    %c0_109 = arith.constant 0 : index
    %256 = vector.load %arg1[%c0_105, %c3_106, %c0_107, %c0_108, %c0_109] : memref<2x4x8x3x108xf32, #tpu.memory_space<vmem>>, vector<1x1x1x3x108xf32>
    %257 = vector.shape_cast %256 : vector<1x1x1x3x108xf32> to vector<3x108xf32>
    %258 = arith.mulf %1, %257 : vector<3x108xf32>
    %259 = arith.mulf %9, %257 : vector<3x108xf32>
    %260 = arith.addf %197, %259 : vector<3x108xf32>
    %261 = arith.mulf %17, %257 : vector<3x108xf32>
    %262 = arith.addf %205, %261 : vector<3x108xf32>
    %263 = arith.mulf %25, %257 : vector<3x108xf32>
    %264 = arith.addf %213, %263 : vector<3x108xf32>
    %c0_110 = arith.constant 0 : index
    %c3_111 = arith.constant 3 : index
    %c1_112 = arith.constant 1 : index
    %c0_113 = arith.constant 0 : index
    %c0_114 = arith.constant 0 : index
    %265 = vector.load %arg1[%c0_110, %c3_111, %c1_112, %c0_113, %c0_114] : memref<2x4x8x3x108xf32, #tpu.memory_space<vmem>>, vector<1x1x1x3x108xf32>
    %266 = vector.shape_cast %265 : vector<1x1x1x3x108xf32> to vector<3x108xf32>
    %267 = arith.mulf %1, %266 : vector<3x108xf32>
    %268 = arith.mulf %3, %266 : vector<3x108xf32>
    %269 = arith.addf %258, %268 : vector<3x108xf32>
    %270 = arith.mulf %9, %266 : vector<3x108xf32>
    %271 = arith.addf %221, %270 : vector<3x108xf32>
    %272 = arith.mulf %11, %266 : vector<3x108xf32>
    %273 = arith.addf %260, %272 : vector<3x108xf32>
    %274 = arith.mulf %17, %266 : vector<3x108xf32>
    %275 = arith.addf %227, %274 : vector<3x108xf32>
    %276 = arith.mulf %19, %266 : vector<3x108xf32>
    %277 = arith.addf %262, %276 : vector<3x108xf32>
    %278 = arith.mulf %25, %266 : vector<3x108xf32>
    %279 = arith.addf %233, %278 : vector<3x108xf32>
    %280 = arith.mulf %27, %266 : vector<3x108xf32>
    %281 = arith.addf %264, %280 : vector<3x108xf32>
    %c0_115 = arith.constant 0 : index
    %c3_116 = arith.constant 3 : index
    %c2_117 = arith.constant 2 : index
    %c0_118 = arith.constant 0 : index
    %c0_119 = arith.constant 0 : index
    %282 = vector.load %arg1[%c0_115, %c3_116, %c2_117, %c0_118, %c0_119] : memref<2x4x8x3x108xf32, #tpu.memory_space<vmem>>, vector<1x1x1x3x108xf32>
    %283 = vector.shape_cast %282 : vector<1x1x1x3x108xf32> to vector<3x108xf32>
    %284 = arith.mulf %1, %283 : vector<3x108xf32>
    %285 = arith.mulf %3, %283 : vector<3x108xf32>
    %286 = arith.addf %267, %285 : vector<3x108xf32>
    %287 = arith.mulf %5, %283 : vector<3x108xf32>
    %288 = arith.addf %269, %287 : vector<3x108xf32>
    %289 = arith.mulf %9, %283 : vector<3x108xf32>
    %290 = arith.addf %239, %289 : vector<3x108xf32>
    %291 = arith.mulf %11, %283 : vector<3x108xf32>
    %292 = arith.addf %271, %291 : vector<3x108xf32>
    %293 = arith.mulf %13, %283 : vector<3x108xf32>
    %294 = arith.addf %273, %293 : vector<3x108xf32>
    %295 = arith.mulf %17, %283 : vector<3x108xf32>
    %296 = arith.addf %243, %295 : vector<3x108xf32>
    %297 = arith.mulf %19, %283 : vector<3x108xf32>
    %298 = arith.addf %275, %297 : vector<3x108xf32>
    %299 = arith.mulf %21, %283 : vector<3x108xf32>
    %300 = arith.addf %277, %299 : vector<3x108xf32>
    %301 = arith.mulf %25, %283 : vector<3x108xf32>
    %302 = arith.addf %247, %301 : vector<3x108xf32>
    %303 = arith.mulf %27, %283 : vector<3x108xf32>
    %304 = arith.addf %279, %303 : vector<3x108xf32>
    %305 = arith.mulf %29, %283 : vector<3x108xf32>
    %306 = arith.addf %281, %305 : vector<3x108xf32>
    %c0_120 = arith.constant 0 : index
    %c3_121 = arith.constant 3 : index
    %c3_122 = arith.constant 3 : index
    %c0_123 = arith.constant 0 : index
    %c0_124 = arith.constant 0 : index
    %307 = vector.load %arg1[%c0_120, %c3_121, %c3_122, %c0_123, %c0_124] : memref<2x4x8x3x108xf32, #tpu.memory_space<vmem>>, vector<1x1x1x3x108xf32>
    %308 = vector.shape_cast %307 : vector<1x1x1x3x108xf32> to vector<3x108xf32>
    %309 = arith.mulf %1, %308 : vector<3x108xf32>
    %310 = arith.mulf %3, %308 : vector<3x108xf32>
    %311 = arith.addf %284, %310 : vector<3x108xf32>
    %312 = arith.mulf %5, %308 : vector<3x108xf32>
    %313 = arith.addf %286, %312 : vector<3x108xf32>
    %314 = arith.mulf %7, %308 : vector<3x108xf32>
    %315 = arith.addf %288, %314 : vector<3x108xf32>
    %316 = arith.mulf %9, %308 : vector<3x108xf32>
    %317 = arith.addf %251, %316 : vector<3x108xf32>
    %318 = arith.mulf %11, %308 : vector<3x108xf32>
    %319 = arith.addf %290, %318 : vector<3x108xf32>
    %320 = arith.mulf %13, %308 : vector<3x108xf32>
    %321 = arith.addf %292, %320 : vector<3x108xf32>
    %322 = arith.mulf %15, %308 : vector<3x108xf32>
    %323 = arith.addf %294, %322 : vector<3x108xf32>
    %324 = arith.mulf %17, %308 : vector<3x108xf32>
    %325 = arith.addf %253, %324 : vector<3x108xf32>
    %326 = arith.mulf %19, %308 : vector<3x108xf32>
    %327 = arith.addf %296, %326 : vector<3x108xf32>
    %328 = arith.mulf %21, %308 : vector<3x108xf32>
    %329 = arith.addf %298, %328 : vector<3x108xf32>
    %330 = arith.mulf %23, %308 : vector<3x108xf32>
    %331 = arith.addf %300, %330 : vector<3x108xf32>
    %332 = arith.mulf %25, %308 : vector<3x108xf32>
    %333 = arith.addf %255, %332 : vector<3x108xf32>
    %334 = arith.mulf %27, %308 : vector<3x108xf32>
    %335 = arith.addf %302, %334 : vector<3x108xf32>
    %336 = arith.mulf %29, %308 : vector<3x108xf32>
    %337 = arith.addf %304, %336 : vector<3x108xf32>
    %338 = arith.mulf %31, %308 : vector<3x108xf32>
    %339 = arith.addf %306, %338 : vector<3x108xf32>
    %c0_125 = arith.constant 0 : index
    %c3_126 = arith.constant 3 : index
    %c4_127 = arith.constant 4 : index
    %c0_128 = arith.constant 0 : index
    %c0_129 = arith.constant 0 : index
    %340 = vector.load %arg1[%c0_125, %c3_126, %c4_127, %c0_128, %c0_129] : memref<2x4x8x3x108xf32, #tpu.memory_space<vmem>>, vector<1x1x1x3x108xf32>
    %341 = vector.shape_cast %340 : vector<1x1x1x3x108xf32> to vector<3x108xf32>
    %342 = arith.mulf %3, %341 : vector<3x108xf32>
    %343 = arith.addf %309, %342 : vector<3x108xf32>
    %344 = arith.mulf %5, %341 : vector<3x108xf32>
    %345 = arith.addf %311, %344 : vector<3x108xf32>
    %346 = arith.mulf %7, %341 : vector<3x108xf32>
    %347 = arith.addf %313, %346 : vector<3x108xf32>
    %348 = arith.mulf %11, %341 : vector<3x108xf32>
    %349 = arith.addf %317, %348 : vector<3x108xf32>
    %350 = arith.mulf %13, %341 : vector<3x108xf32>
    %351 = arith.addf %319, %350 : vector<3x108xf32>
    %352 = arith.mulf %15, %341 : vector<3x108xf32>
    %353 = arith.addf %321, %352 : vector<3x108xf32>
    %354 = arith.mulf %19, %341 : vector<3x108xf32>
    %355 = arith.addf %325, %354 : vector<3x108xf32>
    %356 = arith.mulf %21, %341 : vector<3x108xf32>
    %357 = arith.addf %327, %356 : vector<3x108xf32>
    %358 = arith.mulf %23, %341 : vector<3x108xf32>
    %359 = arith.addf %329, %358 : vector<3x108xf32>
    %360 = arith.mulf %27, %341 : vector<3x108xf32>
    %361 = arith.addf %333, %360 : vector<3x108xf32>
    %362 = arith.mulf %29, %341 : vector<3x108xf32>
    %363 = arith.addf %335, %362 : vector<3x108xf32>
    %364 = arith.mulf %31, %341 : vector<3x108xf32>
    %365 = arith.addf %337, %364 : vector<3x108xf32>
    %c0_130 = arith.constant 0 : index
    %c3_131 = arith.constant 3 : index
    %c5_132 = arith.constant 5 : index
    %c0_133 = arith.constant 0 : index
    %c0_134 = arith.constant 0 : index
    %366 = vector.load %arg1[%c0_130, %c3_131, %c5_132, %c0_133, %c0_134] : memref<2x4x8x3x108xf32, #tpu.memory_space<vmem>>, vector<1x1x1x3x108xf32>
    %367 = vector.shape_cast %366 : vector<1x1x1x3x108xf32> to vector<3x108xf32>
    %368 = arith.mulf %5, %367 : vector<3x108xf32>
    %369 = arith.addf %343, %368 : vector<3x108xf32>
    %370 = arith.mulf %7, %367 : vector<3x108xf32>
    %371 = arith.addf %345, %370 : vector<3x108xf32>
    %372 = arith.mulf %13, %367 : vector<3x108xf32>
    %373 = arith.addf %349, %372 : vector<3x108xf32>
    %374 = arith.mulf %15, %367 : vector<3x108xf32>
    %375 = arith.addf %351, %374 : vector<3x108xf32>
    %376 = arith.mulf %21, %367 : vector<3x108xf32>
    %377 = arith.addf %355, %376 : vector<3x108xf32>
    %378 = arith.mulf %23, %367 : vector<3x108xf32>
    %379 = arith.addf %357, %378 : vector<3x108xf32>
    %380 = arith.mulf %29, %367 : vector<3x108xf32>
    %381 = arith.addf %361, %380 : vector<3x108xf32>
    %382 = arith.mulf %31, %367 : vector<3x108xf32>
    %383 = arith.addf %363, %382 : vector<3x108xf32>
    %c0_135 = arith.constant 0 : index
    %c3_136 = arith.constant 3 : index
    %c6_137 = arith.constant 6 : index
    %c0_138 = arith.constant 0 : index
    %c0_139 = arith.constant 0 : index
    %384 = vector.load %arg1[%c0_135, %c3_136, %c6_137, %c0_138, %c0_139] : memref<2x4x8x3x108xf32, #tpu.memory_space<vmem>>, vector<1x1x1x3x108xf32>
    %385 = vector.shape_cast %384 : vector<1x1x1x3x108xf32> to vector<3x108xf32>
    %386 = arith.mulf %7, %385 : vector<3x108xf32>
    %387 = arith.addf %369, %386 : vector<3x108xf32>
    %388 = arith.mulf %15, %385 : vector<3x108xf32>
    %389 = arith.addf %373, %388 : vector<3x108xf32>
    %390 = arith.mulf %23, %385 : vector<3x108xf32>
    %391 = arith.addf %377, %390 : vector<3x108xf32>
    %392 = arith.mulf %31, %385 : vector<3x108xf32>
    %393 = arith.addf %381, %392 : vector<3x108xf32>
    %c1_140 = arith.constant 1 : index
    %c0_141 = arith.constant 0 : index
    %c0_142 = arith.constant 0 : index
    %c0_143 = arith.constant 0 : index
    %c0_144 = arith.constant 0 : index
    %394 = vector.load %arg1[%c1_140, %c0_141, %c0_142, %c0_143, %c0_144] : memref<2x4x8x3x108xf32, #tpu.memory_space<vmem>>, vector<1x1x1x3x108xf32>
    %395 = vector.shape_cast %394 : vector<1x1x1x3x108xf32> to vector<3x108xf32>
    %396 = arith.mulf %9, %395 : vector<3x108xf32>
    %397 = arith.addf %315, %396 : vector<3x108xf32>
    %398 = arith.mulf %17, %395 : vector<3x108xf32>
    %399 = arith.addf %323, %398 : vector<3x108xf32>
    %400 = arith.mulf %25, %395 : vector<3x108xf32>
    %401 = arith.addf %331, %400 : vector<3x108xf32>
    %c1_145 = arith.constant 1 : index
    %c0_146 = arith.constant 0 : index
    %c1_147 = arith.constant 1 : index
    %c0_148 = arith.constant 0 : index
    %c0_149 = arith.constant 0 : index
    %402 = vector.load %arg1[%c1_145, %c0_146, %c1_147, %c0_148, %c0_149] : memref<2x4x8x3x108xf32, #tpu.memory_space<vmem>>, vector<1x1x1x3x108xf32>
    %403 = vector.shape_cast %402 : vector<1x1x1x3x108xf32> to vector<3x108xf32>
    %404 = arith.mulf %9, %403 : vector<3x108xf32>
    %405 = arith.addf %347, %404 : vector<3x108xf32>
    %406 = arith.mulf %11, %403 : vector<3x108xf32>
    %407 = arith.addf %397, %406 : vector<3x108xf32>
    %408 = arith.mulf %17, %403 : vector<3x108xf32>
    %409 = arith.addf %353, %408 : vector<3x108xf32>
    %410 = arith.mulf %19, %403 : vector<3x108xf32>
    %411 = arith.addf %399, %410 : vector<3x108xf32>
    %412 = arith.mulf %25, %403 : vector<3x108xf32>
    %413 = arith.addf %359, %412 : vector<3x108xf32>
    %414 = arith.mulf %27, %403 : vector<3x108xf32>
    %415 = arith.addf %401, %414 : vector<3x108xf32>
    %c1_150 = arith.constant 1 : index
    %c0_151 = arith.constant 0 : index
    %c2_152 = arith.constant 2 : index
    %c0_153 = arith.constant 0 : index
    %c0_154 = arith.constant 0 : index
    %416 = vector.load %arg1[%c1_150, %c0_151, %c2_152, %c0_153, %c0_154] : memref<2x4x8x3x108xf32, #tpu.memory_space<vmem>>, vector<1x1x1x3x108xf32>
    %417 = vector.shape_cast %416 : vector<1x1x1x3x108xf32> to vector<3x108xf32>
    %418 = arith.mulf %9, %417 : vector<3x108xf32>
    %419 = arith.addf %371, %418 : vector<3x108xf32>
    %420 = arith.mulf %11, %417 : vector<3x108xf32>
    %421 = arith.addf %405, %420 : vector<3x108xf32>
    %422 = arith.mulf %13, %417 : vector<3x108xf32>
    %423 = arith.addf %407, %422 : vector<3x108xf32>
    %424 = arith.mulf %17, %417 : vector<3x108xf32>
    %425 = arith.addf %375, %424 : vector<3x108xf32>
    %426 = arith.mulf %19, %417 : vector<3x108xf32>
    %427 = arith.addf %409, %426 : vector<3x108xf32>
    %428 = arith.mulf %21, %417 : vector<3x108xf32>
    %429 = arith.addf %411, %428 : vector<3x108xf32>
    %430 = arith.mulf %25, %417 : vector<3x108xf32>
    %431 = arith.addf %379, %430 : vector<3x108xf32>
    %432 = arith.mulf %27, %417 : vector<3x108xf32>
    %433 = arith.addf %413, %432 : vector<3x108xf32>
    %434 = arith.mulf %29, %417 : vector<3x108xf32>
    %435 = arith.addf %415, %434 : vector<3x108xf32>
    %c1_155 = arith.constant 1 : index
    %c0_156 = arith.constant 0 : index
    %c3_157 = arith.constant 3 : index
    %c0_158 = arith.constant 0 : index
    %c0_159 = arith.constant 0 : index
    %436 = vector.load %arg1[%c1_155, %c0_156, %c3_157, %c0_158, %c0_159] : memref<2x4x8x3x108xf32, #tpu.memory_space<vmem>>, vector<1x1x1x3x108xf32>
    %437 = vector.shape_cast %436 : vector<1x1x1x3x108xf32> to vector<3x108xf32>
    %438 = arith.mulf %9, %437 : vector<3x108xf32>
    %439 = arith.addf %387, %438 : vector<3x108xf32>
    %440 = arith.mulf %11, %437 : vector<3x108xf32>
    %441 = arith.addf %419, %440 : vector<3x108xf32>
    %442 = arith.mulf %13, %437 : vector<3x108xf32>
    %443 = arith.addf %421, %442 : vector<3x108xf32>
    %444 = arith.mulf %15, %437 : vector<3x108xf32>
    %445 = arith.addf %423, %444 : vector<3x108xf32>
    %446 = arith.mulf %17, %437 : vector<3x108xf32>
    %447 = arith.addf %389, %446 : vector<3x108xf32>
    %448 = arith.mulf %19, %437 : vector<3x108xf32>
    %449 = arith.addf %425, %448 : vector<3x108xf32>
    %450 = arith.mulf %21, %437 : vector<3x108xf32>
    %451 = arith.addf %427, %450 : vector<3x108xf32>
    %452 = arith.mulf %23, %437 : vector<3x108xf32>
    %453 = arith.addf %429, %452 : vector<3x108xf32>
    %454 = arith.mulf %25, %437 : vector<3x108xf32>
    %455 = arith.addf %391, %454 : vector<3x108xf32>
    %456 = arith.mulf %27, %437 : vector<3x108xf32>
    %457 = arith.addf %431, %456 : vector<3x108xf32>
    %458 = arith.mulf %29, %437 : vector<3x108xf32>
    %459 = arith.addf %433, %458 : vector<3x108xf32>
    %460 = arith.mulf %31, %437 : vector<3x108xf32>
    %461 = arith.addf %435, %460 : vector<3x108xf32>
    %c1_160 = arith.constant 1 : index
    %c0_161 = arith.constant 0 : index
    %c4_162 = arith.constant 4 : index
    %c0_163 = arith.constant 0 : index
    %c0_164 = arith.constant 0 : index
    %462 = vector.load %arg1[%c1_160, %c0_161, %c4_162, %c0_163, %c0_164] : memref<2x4x8x3x108xf32, #tpu.memory_space<vmem>>, vector<1x1x1x3x108xf32>
    %463 = vector.shape_cast %462 : vector<1x1x1x3x108xf32> to vector<3x108xf32>
    %464 = arith.mulf %11, %463 : vector<3x108xf32>
    %465 = arith.addf %439, %464 : vector<3x108xf32>
    %466 = arith.mulf %13, %463 : vector<3x108xf32>
    %467 = arith.addf %441, %466 : vector<3x108xf32>
    %468 = arith.mulf %15, %463 : vector<3x108xf32>
    %469 = arith.addf %443, %468 : vector<3x108xf32>
    %470 = arith.mulf %19, %463 : vector<3x108xf32>
    %471 = arith.addf %447, %470 : vector<3x108xf32>
    %472 = arith.mulf %21, %463 : vector<3x108xf32>
    %473 = arith.addf %449, %472 : vector<3x108xf32>
    %474 = arith.mulf %23, %463 : vector<3x108xf32>
    %475 = arith.addf %451, %474 : vector<3x108xf32>
    %476 = arith.mulf %27, %463 : vector<3x108xf32>
    %477 = arith.addf %455, %476 : vector<3x108xf32>
    %478 = arith.mulf %29, %463 : vector<3x108xf32>
    %479 = arith.addf %457, %478 : vector<3x108xf32>
    %480 = arith.mulf %31, %463 : vector<3x108xf32>
    %481 = arith.addf %459, %480 : vector<3x108xf32>
    %c1_165 = arith.constant 1 : index
    %c0_166 = arith.constant 0 : index
    %c5_167 = arith.constant 5 : index
    %c0_168 = arith.constant 0 : index
    %c0_169 = arith.constant 0 : index
    %482 = vector.load %arg1[%c1_165, %c0_166, %c5_167, %c0_168, %c0_169] : memref<2x4x8x3x108xf32, #tpu.memory_space<vmem>>, vector<1x1x1x3x108xf32>
    %483 = vector.shape_cast %482 : vector<1x1x1x3x108xf32> to vector<3x108xf32>
    %484 = arith.mulf %13, %483 : vector<3x108xf32>
    %485 = arith.addf %465, %484 : vector<3x108xf32>
    %486 = arith.mulf %15, %483 : vector<3x108xf32>
    %487 = arith.addf %467, %486 : vector<3x108xf32>
    %488 = arith.mulf %21, %483 : vector<3x108xf32>
    %489 = arith.addf %471, %488 : vector<3x108xf32>
    %490 = arith.mulf %23, %483 : vector<3x108xf32>
    %491 = arith.addf %473, %490 : vector<3x108xf32>
    %492 = arith.mulf %29, %483 : vector<3x108xf32>
    %493 = arith.addf %477, %492 : vector<3x108xf32>
    %494 = arith.mulf %31, %483 : vector<3x108xf32>
    %495 = arith.addf %479, %494 : vector<3x108xf32>
    %c1_170 = arith.constant 1 : index
    %c0_171 = arith.constant 0 : index
    %c6_172 = arith.constant 6 : index
    %c0_173 = arith.constant 0 : index
    %c0_174 = arith.constant 0 : index
    %496 = vector.load %arg1[%c1_170, %c0_171, %c6_172, %c0_173, %c0_174] : memref<2x4x8x3x108xf32, #tpu.memory_space<vmem>>, vector<1x1x1x3x108xf32>
    %497 = vector.shape_cast %496 : vector<1x1x1x3x108xf32> to vector<3x108xf32>
    %498 = arith.mulf %15, %497 : vector<3x108xf32>
    %499 = arith.addf %485, %498 : vector<3x108xf32>
    %500 = arith.mulf %23, %497 : vector<3x108xf32>
    %501 = arith.addf %489, %500 : vector<3x108xf32>
    %502 = arith.mulf %31, %497 : vector<3x108xf32>
    %503 = arith.addf %493, %502 : vector<3x108xf32>
    %c1_175 = arith.constant 1 : index
    %c1_176 = arith.constant 1 : index
    %c0_177 = arith.constant 0 : index
    %c0_178 = arith.constant 0 : index
    %c0_179 = arith.constant 0 : index
    %504 = vector.load %arg1[%c1_175, %c1_176, %c0_177, %c0_178, %c0_179] : memref<2x4x8x3x108xf32, #tpu.memory_space<vmem>>, vector<1x1x1x3x108xf32>
    %505 = vector.shape_cast %504 : vector<1x1x1x3x108xf32> to vector<3x108xf32>
    %506 = arith.mulf %17, %505 : vector<3x108xf32>
    %507 = arith.addf %445, %506 : vector<3x108xf32>
    %508 = arith.mulf %25, %505 : vector<3x108xf32>
    %509 = arith.addf %453, %508 : vector<3x108xf32>
    %c1_180 = arith.constant 1 : index
    %c1_181 = arith.constant 1 : index
    %c1_182 = arith.constant 1 : index
    %c0_183 = arith.constant 0 : index
    %c0_184 = arith.constant 0 : index
    %510 = vector.load %arg1[%c1_180, %c1_181, %c1_182, %c0_183, %c0_184] : memref<2x4x8x3x108xf32, #tpu.memory_space<vmem>>, vector<1x1x1x3x108xf32>
    %511 = vector.shape_cast %510 : vector<1x1x1x3x108xf32> to vector<3x108xf32>
    %512 = arith.mulf %17, %511 : vector<3x108xf32>
    %513 = arith.addf %469, %512 : vector<3x108xf32>
    %514 = arith.mulf %19, %511 : vector<3x108xf32>
    %515 = arith.addf %507, %514 : vector<3x108xf32>
    %516 = arith.mulf %25, %511 : vector<3x108xf32>
    %517 = arith.addf %475, %516 : vector<3x108xf32>
    %518 = arith.mulf %27, %511 : vector<3x108xf32>
    %519 = arith.addf %509, %518 : vector<3x108xf32>
    %c1_185 = arith.constant 1 : index
    %c1_186 = arith.constant 1 : index
    %c2_187 = arith.constant 2 : index
    %c0_188 = arith.constant 0 : index
    %c0_189 = arith.constant 0 : index
    %520 = vector.load %arg1[%c1_185, %c1_186, %c2_187, %c0_188, %c0_189] : memref<2x4x8x3x108xf32, #tpu.memory_space<vmem>>, vector<1x1x1x3x108xf32>
    %521 = vector.shape_cast %520 : vector<1x1x1x3x108xf32> to vector<3x108xf32>
    %522 = arith.mulf %17, %521 : vector<3x108xf32>
    %523 = arith.addf %487, %522 : vector<3x108xf32>
    %524 = arith.mulf %19, %521 : vector<3x108xf32>
    %525 = arith.addf %513, %524 : vector<3x108xf32>
    %526 = arith.mulf %21, %521 : vector<3x108xf32>
    %527 = arith.addf %515, %526 : vector<3x108xf32>
    %528 = arith.mulf %25, %521 : vector<3x108xf32>
    %529 = arith.addf %491, %528 : vector<3x108xf32>
    %530 = arith.mulf %27, %521 : vector<3x108xf32>
    %531 = arith.addf %517, %530 : vector<3x108xf32>
    %532 = arith.mulf %29, %521 : vector<3x108xf32>
    %533 = arith.addf %519, %532 : vector<3x108xf32>
    %c1_190 = arith.constant 1 : index
    %c1_191 = arith.constant 1 : index
    %c3_192 = arith.constant 3 : index
    %c0_193 = arith.constant 0 : index
    %c0_194 = arith.constant 0 : index
    %534 = vector.load %arg1[%c1_190, %c1_191, %c3_192, %c0_193, %c0_194] : memref<2x4x8x3x108xf32, #tpu.memory_space<vmem>>, vector<1x1x1x3x108xf32>
    %535 = vector.shape_cast %534 : vector<1x1x1x3x108xf32> to vector<3x108xf32>
    %536 = arith.mulf %17, %535 : vector<3x108xf32>
    %537 = arith.addf %499, %536 : vector<3x108xf32>
    %538 = arith.mulf %19, %535 : vector<3x108xf32>
    %539 = arith.addf %523, %538 : vector<3x108xf32>
    %540 = arith.mulf %21, %535 : vector<3x108xf32>
    %541 = arith.addf %525, %540 : vector<3x108xf32>
    %542 = arith.mulf %23, %535 : vector<3x108xf32>
    %543 = arith.addf %527, %542 : vector<3x108xf32>
    %544 = arith.mulf %25, %535 : vector<3x108xf32>
    %545 = arith.addf %501, %544 : vector<3x108xf32>
    %546 = arith.mulf %27, %535 : vector<3x108xf32>
    %547 = arith.addf %529, %546 : vector<3x108xf32>
    %548 = arith.mulf %29, %535 : vector<3x108xf32>
    %549 = arith.addf %531, %548 : vector<3x108xf32>
    %550 = arith.mulf %31, %535 : vector<3x108xf32>
    %551 = arith.addf %533, %550 : vector<3x108xf32>
    %c1_195 = arith.constant 1 : index
    %c1_196 = arith.constant 1 : index
    %c4_197 = arith.constant 4 : index
    %c0_198 = arith.constant 0 : index
    %c0_199 = arith.constant 0 : index
    %552 = vector.load %arg1[%c1_195, %c1_196, %c4_197, %c0_198, %c0_199] : memref<2x4x8x3x108xf32, #tpu.memory_space<vmem>>, vector<1x1x1x3x108xf32>
    %553 = vector.shape_cast %552 : vector<1x1x1x3x108xf32> to vector<3x108xf32>
    %554 = arith.mulf %19, %553 : vector<3x108xf32>
    %555 = arith.addf %537, %554 : vector<3x108xf32>
    %556 = arith.mulf %21, %553 : vector<3x108xf32>
    %557 = arith.addf %539, %556 : vector<3x108xf32>
    %558 = arith.mulf %23, %553 : vector<3x108xf32>
    %559 = arith.addf %541, %558 : vector<3x108xf32>
    %560 = arith.mulf %27, %553 : vector<3x108xf32>
    %561 = arith.addf %545, %560 : vector<3x108xf32>
    %562 = arith.mulf %29, %553 : vector<3x108xf32>
    %563 = arith.addf %547, %562 : vector<3x108xf32>
    %564 = arith.mulf %31, %553 : vector<3x108xf32>
    %565 = arith.addf %549, %564 : vector<3x108xf32>
    %c1_200 = arith.constant 1 : index
    %c1_201 = arith.constant 1 : index
    %c5_202 = arith.constant 5 : index
    %c0_203 = arith.constant 0 : index
    %c0_204 = arith.constant 0 : index
    %566 = vector.load %arg1[%c1_200, %c1_201, %c5_202, %c0_203, %c0_204] : memref<2x4x8x3x108xf32, #tpu.memory_space<vmem>>, vector<1x1x1x3x108xf32>
    %567 = vector.shape_cast %566 : vector<1x1x1x3x108xf32> to vector<3x108xf32>
    %568 = arith.mulf %21, %567 : vector<3x108xf32>
    %569 = arith.addf %555, %568 : vector<3x108xf32>
    %570 = arith.mulf %23, %567 : vector<3x108xf32>
    %571 = arith.addf %557, %570 : vector<3x108xf32>
    %572 = arith.mulf %29, %567 : vector<3x108xf32>
    %573 = arith.addf %561, %572 : vector<3x108xf32>
    %574 = arith.mulf %31, %567 : vector<3x108xf32>
    %575 = arith.addf %563, %574 : vector<3x108xf32>
    %c1_205 = arith.constant 1 : index
    %c1_206 = arith.constant 1 : index
    %c6_207 = arith.constant 6 : index
    %c0_208 = arith.constant 0 : index
    %c0_209 = arith.constant 0 : index
    %576 = vector.load %arg1[%c1_205, %c1_206, %c6_207, %c0_208, %c0_209] : memref<2x4x8x3x108xf32, #tpu.memory_space<vmem>>, vector<1x1x1x3x108xf32>
    %577 = vector.shape_cast %576 : vector<1x1x1x3x108xf32> to vector<3x108xf32>
    %578 = arith.mulf %23, %577 : vector<3x108xf32>
    %579 = arith.addf %569, %578 : vector<3x108xf32>
    %580 = arith.mulf %31, %577 : vector<3x108xf32>
    %581 = arith.addf %573, %580 : vector<3x108xf32>
    %c1_210 = arith.constant 1 : index
    %c2_211 = arith.constant 2 : index
    %c0_212 = arith.constant 0 : index
    %c0_213 = arith.constant 0 : index
    %c0_214 = arith.constant 0 : index
    %582 = vector.load %arg1[%c1_210, %c2_211, %c0_212, %c0_213, %c0_214] : memref<2x4x8x3x108xf32, #tpu.memory_space<vmem>>, vector<1x1x1x3x108xf32>
    %583 = vector.shape_cast %582 : vector<1x1x1x3x108xf32> to vector<3x108xf32>
    %584 = arith.mulf %25, %583 : vector<3x108xf32>
    %585 = arith.addf %543, %584 : vector<3x108xf32>
    %c1_215 = arith.constant 1 : index
    %c2_216 = arith.constant 2 : index
    %c1_217 = arith.constant 1 : index
    %c0_218 = arith.constant 0 : index
    %c0_219 = arith.constant 0 : index
    %586 = vector.load %arg1[%c1_215, %c2_216, %c1_217, %c0_218, %c0_219] : memref<2x4x8x3x108xf32, #tpu.memory_space<vmem>>, vector<1x1x1x3x108xf32>
    %587 = vector.shape_cast %586 : vector<1x1x1x3x108xf32> to vector<3x108xf32>
    %588 = arith.mulf %25, %587 : vector<3x108xf32>
    %589 = arith.addf %559, %588 : vector<3x108xf32>
    %590 = arith.mulf %27, %587 : vector<3x108xf32>
    %591 = arith.addf %585, %590 : vector<3x108xf32>
    %c1_220 = arith.constant 1 : index
    %c2_221 = arith.constant 2 : index
    %c2_222 = arith.constant 2 : index
    %c0_223 = arith.constant 0 : index
    %c0_224 = arith.constant 0 : index
    %592 = vector.load %arg1[%c1_220, %c2_221, %c2_222, %c0_223, %c0_224] : memref<2x4x8x3x108xf32, #tpu.memory_space<vmem>>, vector<1x1x1x3x108xf32>
    %593 = vector.shape_cast %592 : vector<1x1x1x3x108xf32> to vector<3x108xf32>
    %594 = arith.mulf %25, %593 : vector<3x108xf32>
    %595 = arith.addf %571, %594 : vector<3x108xf32>
    %596 = arith.mulf %27, %593 : vector<3x108xf32>
    %597 = arith.addf %589, %596 : vector<3x108xf32>
    %598 = arith.mulf %29, %593 : vector<3x108xf32>
    %599 = arith.addf %591, %598 : vector<3x108xf32>
    %c1_225 = arith.constant 1 : index
    %c2_226 = arith.constant 2 : index
    %c3_227 = arith.constant 3 : index
    %c0_228 = arith.constant 0 : index
    %c0_229 = arith.constant 0 : index
    %600 = vector.load %arg1[%c1_225, %c2_226, %c3_227, %c0_228, %c0_229] : memref<2x4x8x3x108xf32, #tpu.memory_space<vmem>>, vector<1x1x1x3x108xf32>
    %601 = vector.shape_cast %600 : vector<1x1x1x3x108xf32> to vector<3x108xf32>
    %602 = arith.mulf %25, %601 : vector<3x108xf32>
    %603 = arith.addf %579, %602 : vector<3x108xf32>
    %604 = arith.mulf %27, %601 : vector<3x108xf32>
    %605 = arith.addf %595, %604 : vector<3x108xf32>
    %606 = arith.mulf %29, %601 : vector<3x108xf32>
    %607 = arith.addf %597, %606 : vector<3x108xf32>
    %608 = arith.mulf %31, %601 : vector<3x108xf32>
    %609 = arith.addf %599, %608 : vector<3x108xf32>
    %c1_230 = arith.constant 1 : index
    %c2_231 = arith.constant 2 : index
    %c4_232 = arith.constant 4 : index
    %c0_233 = arith.constant 0 : index
    %c0_234 = arith.constant 0 : index
    %610 = vector.load %arg1[%c1_230, %c2_231, %c4_232, %c0_233, %c0_234] : memref<2x4x8x3x108xf32, #tpu.memory_space<vmem>>, vector<1x1x1x3x108xf32>
    %611 = vector.shape_cast %610 : vector<1x1x1x3x108xf32> to vector<3x108xf32>
    %612 = arith.mulf %27, %611 : vector<3x108xf32>
    %613 = arith.addf %603, %612 : vector<3x108xf32>
    %614 = arith.mulf %29, %611 : vector<3x108xf32>
    %615 = arith.addf %605, %614 : vector<3x108xf32>
    %616 = arith.mulf %31, %611 : vector<3x108xf32>
    %617 = arith.addf %607, %616 : vector<3x108xf32>
    %c1_235 = arith.constant 1 : index
    %c2_236 = arith.constant 2 : index
    %c5_237 = arith.constant 5 : index
    %c0_238 = arith.constant 0 : index
    %c0_239 = arith.constant 0 : index
    %618 = vector.load %arg1[%c1_235, %c2_236, %c5_237, %c0_238, %c0_239] : memref<2x4x8x3x108xf32, #tpu.memory_space<vmem>>, vector<1x1x1x3x108xf32>
    %619 = vector.shape_cast %618 : vector<1x1x1x3x108xf32> to vector<3x108xf32>
    %620 = arith.mulf %29, %619 : vector<3x108xf32>
    %621 = arith.addf %613, %620 : vector<3x108xf32>
    %622 = arith.mulf %31, %619 : vector<3x108xf32>
    %623 = arith.addf %615, %622 : vector<3x108xf32>
    %c1_240 = arith.constant 1 : index
    %c2_241 = arith.constant 2 : index
    %c6_242 = arith.constant 6 : index
    %c0_243 = arith.constant 0 : index
    %c0_244 = arith.constant 0 : index
    %624 = vector.load %arg1[%c1_240, %c2_241, %c6_242, %c0_243, %c0_244] : memref<2x4x8x3x108xf32, #tpu.memory_space<vmem>>, vector<1x1x1x3x108xf32>
    %625 = vector.shape_cast %624 : vector<1x1x1x3x108xf32> to vector<3x108xf32>
    %626 = arith.mulf %31, %625 : vector<3x108xf32>
    %627 = arith.addf %621, %626 : vector<3x108xf32>
    %628 = arith.maximumf %339, %365 : vector<3x108xf32>
    %629 = arith.maximumf %628, %383 : vector<3x108xf32>
    %630 = arith.maximumf %629, %393 : vector<3x108xf32>
    %631 = arith.maximumf %630, %461 : vector<3x108xf32>
    %632 = arith.maximumf %631, %481 : vector<3x108xf32>
    %633 = arith.maximumf %632, %495 : vector<3x108xf32>
    %634 = arith.maximumf %633, %503 : vector<3x108xf32>
    %635 = arith.maximumf %634, %551 : vector<3x108xf32>
    %636 = arith.maximumf %635, %565 : vector<3x108xf32>
    %637 = arith.maximumf %636, %575 : vector<3x108xf32>
    %638 = arith.maximumf %637, %581 : vector<3x108xf32>
    %639 = arith.maximumf %638, %609 : vector<3x108xf32>
    %640 = arith.maximumf %639, %617 : vector<3x108xf32>
    %641 = arith.maximumf %640, %623 : vector<3x108xf32>
    %642 = arith.maximumf %641, %627 : vector<3x108xf32>
    %643 = vector.broadcast %32 : f32 to vector<3x108xf32>
    %644 = arith.addf %642, %643 : vector<3x108xf32>
    %cst = arith.constant 0.000000e+00 : f32
    %645 = vector.broadcast %cst : f32 to vector<3x108xf32>
    %646 = arith.maximumf %644, %645 : vector<3x108xf32>
    %647 = vector.extract_strided_slice %646 {offsets = [0, 0], sizes = [1, 108], strides = [1, 1]} : vector<3x108xf32> to vector<1x108xf32>
    %c0_245 = arith.constant 0 : index
    %c0_246 = arith.constant 0 : index
    %648 = vector.load %arg2[%c0_245, %c0_246] : memref<368x64xf32, #tpu.memory_space<vmem>>, vector<108x64xf32>
    %cst_247 = arith.constant dense<0.000000e+00> : vector<1x64xf32>
    %649 = tpu.matmul %647, %648, %cst_247 {dimension_numbers = #tpu.dot_dimension_numbers<[1], [0], [0], [1], [0, 0, 1, 1], [], []>} : vector<1x108xf32>, vector<108x64xf32>, vector<1x64xf32> -> vector<1x64xf32>
    %650 = vector.extract_strided_slice %646 {offsets = [1, 0], sizes = [1, 108], strides = [1, 1]} : vector<3x108xf32> to vector<1x108xf32>
    %c112 = arith.constant 112 : index
    %c0_248 = arith.constant 0 : index
    %651 = vector.load %arg2[%c112, %c0_248] : memref<368x64xf32, #tpu.memory_space<vmem>>, vector<108x64xf32>
    %cst_249 = arith.constant dense<0.000000e+00> : vector<1x64xf32>
    %652 = tpu.matmul %650, %651, %cst_249 {dimension_numbers = #tpu.dot_dimension_numbers<[1], [0], [0], [1], [0, 0, 1, 1], [], []>} : vector<1x108xf32>, vector<108x64xf32>, vector<1x64xf32> -> vector<1x64xf32>
    %653 = vector.extract_strided_slice %646 {offsets = [2, 0], sizes = [1, 108], strides = [1, 1]} : vector<3x108xf32> to vector<1x108xf32>
    %c224 = arith.constant 224 : index
    %c0_250 = arith.constant 0 : index
    %654 = vector.load %arg2[%c224, %c0_250] : memref<368x64xf32, #tpu.memory_space<vmem>>, vector<108x64xf32>
    %cst_251 = arith.constant dense<0.000000e+00> : vector<1x64xf32>
    %655 = tpu.matmul %653, %654, %cst_251 {dimension_numbers = #tpu.dot_dimension_numbers<[1], [0], [0], [1], [0, 0, 1, 1], [], []>} : vector<1x108xf32>, vector<108x64xf32>, vector<1x64xf32> -> vector<1x64xf32>
    %c336 = arith.constant 336 : index
    %c0_252 = arith.constant 0 : index
    %656 = vector.load %arg2[%c336, %c0_252] : memref<368x64xf32, #tpu.memory_space<vmem>>, vector<1x64xf32>
    %657 = arith.addf %649, %652 : vector<1x64xf32>
    %658 = arith.addf %656, %657 : vector<1x64xf32>
    %659 = arith.addf %658, %655 : vector<1x64xf32>
    %cst_253 = arith.constant 0.000000e+00 : f32
    %660 = vector.broadcast %cst_253 : f32 to vector<1x64xf32>
    %661 = arith.maximumf %659, %660 : vector<1x64xf32>
    %c344 = arith.constant 344 : index
    %c0_254 = arith.constant 0 : index
    %662 = vector.load %arg2[%c344, %c0_254] : memref<368x64xf32, #tpu.memory_space<vmem>>, vector<8x64xf32>
    %c352 = arith.constant 352 : index
    %c0_255 = arith.constant 0 : index
    %663 = vector.load %arg2[%c352, %c0_255] : memref<368x64xf32, #tpu.memory_space<vmem>>, vector<8x1xf32>
    %664 = vector.broadcast %661 : vector<1x64xf32> to vector<8x64xf32>
    %665 = arith.mulf %664, %662 : vector<8x64xf32>
    %cst_256 = arith.constant dense<0.000000e+00> : vector<8xf32>
    %666 = vector.multi_reduction <add>, %665, %cst_256 [1] : vector<8x64xf32> to vector<8xf32>
    %667 = vector.shape_cast %666 : vector<8xf32> to vector<8x1xf32>
    %668 = arith.addf %667, %663 : vector<8x1xf32>
    %cst_257 = arith.constant 0.000000e+00 : f32
    %669 = vector.broadcast %cst_257 : f32 to vector<8x1xf32>
    %670 = arith.maximumf %668, %669 : vector<8x1xf32>
    %c360 = arith.constant 360 : index
    %c0_258 = arith.constant 0 : index
    %671 = vector.load %arg2[%c360, %c0_258] : memref<368x64xf32, #tpu.memory_space<vmem>>, vector<8x1xf32>
    %672 = arith.mulf %670, %671 : vector<8x1xf32>
    %cst_259 = arith.constant dense<0.000000e+00> : vector<1xf32>
    %673 = vector.multi_reduction <add>, %672, %cst_259 [0] : vector<8x1xf32> to vector<1xf32>
    %674 = vector.shape_cast %673 : vector<1xf32> to vector<1x1xf32>
    %675 = vector.broadcast %33 : f32 to vector<1x1xf32>
    %676 = arith.addf %674, %675 : vector<1x1xf32>
    %cst_260 = arith.constant 0.000000e+00 : f32
    %677 = vector.broadcast %cst_260 : f32 to vector<1x1xf32>
    %678 = arith.maximumf %676, %677 : vector<1x1xf32>
    %c0_261 = arith.constant 0 : index
    %c0_262 = arith.constant 0 : index
    %679 = vector.load %arg3[%c0_261, %c0_262] : memref<1x1xf32, #tpu.memory_space<vmem>>, vector<1x1xf32>
    tpu.vector_store %arg3[%c0_261, %c0_262], %678 {strides = array<i32>} : memref<1x1xf32, #tpu.memory_space<vmem>>, vector<1x1xf32>,
    return
  }
}

</mosaic_0001>

<llo_original>
// kernel: dsmodel0_forward.1
$region0: #{dsmodel0_forward.1}
  #allocation0 [shape = 'u32[]', space=smem, size = 0x4, offset = 0x4, fixed_abs, tag = 'smem constant byte address 0x4 - core index']
  #allocation1 [shape = 'u32[72,128]{1,0:T(1,128)}', space=vmem, size = 0x9000, scoped, tag = 'internal scratch']
  %s0 = inlined_call_operand.vmem [shape: f32[18], index: 0, kind: input, shape index: {}]
  %s1 = inlined_call_operand.vmem [shape: f32[2,4,8,3,108], index: 1, kind: input, shape index: {}]
  %s2 = inlined_call_operand.vmem [shape: f32[368,64], index: 2, kind: input, shape index: {}]
  %s3 = inlined_call_operand.hbm [shape: f32[1,1], index: 3, kind: output, shape index: {}]
  %s4 = sld [smem:[#allocation0]]
  $region26: #{dsmodel0_forward.1} parent=0
    _
  %s6 = ssub.s32 1, %s4
  %s7 = scalar_select 0, %s6, %s4
  $region1: #{dsmodel0_forward.1} parent=0
    #allocation2 [shape = 'u8[512]{0}', space=smem, size = 0x200, scoped, tag = 'input window, operand 0, single buffered']
    #allocation3 [shape = 's32[1]{0}', space=sflag, size = 0x4, scoped, tag = 'scoped memory for dsmodel0_forward.1']
    #allocation4 [shape = 's32[1]{0}', space=sflag, size = 0x4, scoped, tag = 'scoped memory for dsmodel0_forward.1']
    #allocation5 [shape = 'u8[512]{0}', space=vmem, size = 0x400, scoped, tag = 'output window, operand 0, single buffered']
    %8 = vsyncpa [#allocation4], 0
    %9 = vsyncpa [#allocation3], 0
    // Predicated region
    $region2: #{dsmodel0_forward.1} parent=1 // pred_check
      _
    $region3: #{dsmodel0_forward.1} parent=1 // pred_check_branch
      %11 = sbr.rel (0) target = $region5
    $region4: #{dsmodel0_forward.1} parent=1 // pred_region
      %13 = vsyncadd [#allocation4], 0
      %s15 = sshll.u32 %s0, 4
      %s16 = int_to_ptr.vmem [resolvable:$true] %s15
      %18 = dma.vmem_to_smem %s16, 16, [#allocation2], [#allocation4]
    $region5: #{dsmodel0_forward.1} parent=1 // pred_fallthru
      _
    // Predicated region
    $region6: #{dsmodel0_forward.1} parent=1 // pred_check
      _
    $region7: #{dsmodel0_forward.1} parent=1 // pred_check_branch
      %20 = sbr.rel (0) target = $region9
    $region8: #{dsmodel0_forward.1} parent=1 // pred_region
      _
    $region9: #{dsmodel0_forward.1} parent=1 // pred_fallthru
      _
    // Predicated region
    $region10: #{dsmodel0_forward.1} parent=1 // pred_check
      _
    $region11: #{dsmodel0_forward.1} parent=1 // pred_check_branch
      %22 = sbr.rel (0) target = $region13
    $region12: #{dsmodel0_forward.1} parent=1 // pred_region
      _
    $region13: #{dsmodel0_forward.1} parent=1 // pred_fallthru
      _
    // Predicated region
    $region14: #{dsmodel0_forward.1} parent=1 // pred_check
      _
    $region15: #{dsmodel0_forward.1} parent=1 // pred_check_branch
      %24 = sbr.rel (0) target = $region17
    $region16: #{dsmodel0_forward.1} parent=1 // pred_region
      %26 = dma.done [#allocation4], 16
    $region17: #{dsmodel0_forward.1} parent=1 // pred_fallthru
      _
    %27 = sfence
    %s28 = sld [smem:[#allocation2]]
    %v29 = vstv %s28
    %s30 = sld [smem:[#allocation2 + $0x1]]
    %v31 = vstv %s30
    %s32 = sld [smem:[#allocation2 + $0x2]]
    %v33 = vstv %s32
    %s34 = sld [smem:[#allocation2 + $0x3]]
    %v35 = vstv %s34
    %s36 = sld [smem:[#allocation2 + $0x4]]
    %v37 = vstv %s36
    %s38 = sld [smem:[#allocation2 + $0x5]]
    %v39 = vstv %s38
    %s40 = sld [smem:[#allocation2 + $0x6]]
    %v41 = vstv %s40
    %s42 = sld [smem:[#allocation2 + $0x7]]
    %v43 = vstv %s42
    %s44 = sld [smem:[#allocation2 + $0x8]]
    %v45 = vstv %s44
    %s46 = sld [smem:[#allocation2 + $0x9]]
    %v47 = vstv %s46
    %s48 = sld [smem:[#allocation2 + $0xa]]
    %v49 = vstv %s48
    %s50 = sld [smem:[#allocation2 + $0xb]]
    %v51 = vstv %s50
    %s52 = sld [smem:[#allocation2 + $0xc]]
    %v53 = vstv %s52
    %s54 = sld [smem:[#allocation2 + $0xd]]
    %v55 = vstv %s54
    %s56 = sld [smem:[#allocation2 + $0xe]]
    %v57 = vstv %s56
    %s58 = sld [smem:[#allocation2 + $0xf]]
    %v59 = vstv %s58
    %s60 = sld [smem:[#allocation2 + $0x10]]
    %s61 = sld [smem:[#allocation2 + $0x11]]
    %v62 = vld [vmem:[%s1] sm:$0x7]
    %v63 = vmul.f32 %v29, %v62
    %s64 = scalar_lea.vmem %s1, 4
    %v65 = vld [vmem:[%s64] sm:$0x7]
    %v66 = vmul.f32 %v29, %v65
    %v67 = vmul.f32 %v31, %v65
    %v68 = vadd.f32 %v63, %v67
    %s69 = scalar_lea.vmem %s1, 8
    %v70 = vld [vmem:[%s69] sm:$0x7]
    %v71 = vmul.f32 %v29, %v70
    %v72 = vmul.f32 %v31, %v70
    %v73 = vadd.f32 %v66, %v72
    %v74 = vmul.f32 %v33, %v70
    %v75 = vadd.f32 %v68, %v74
    %s76 = scalar_lea.vmem %s1, 12
    %v77 = vld [vmem:[%s76] sm:$0x7]
    %v78 = vmul.f32 %v29, %v77
    %v79 = vmul.f32 %v31, %v77
    %v80 = vadd.f32 %v71, %v79
    %v81 = vmul.f32 %v33, %v77
    %v82 = vadd.f32 %v73, %v81
    %v83 = vmul.f32 %v35, %v77
    %v84 = vadd.f32 %v75, %v83
    %s85 = scalar_lea.vmem %s1, 16
    %v86 = vld [vmem:[%s85] sm:$0x7]
    %v87 = vmul.f32 %v31, %v86
    %v88 = vadd.f32 %v78, %v87
    %v89 = vmul.f32 %v33, %v86
    %v90 = vadd.f32 %v80, %v89
    %v91 = vmul.f32 %v35, %v86
    %v92 = vadd.f32 %v82, %v91
    %s93 = scalar_lea.vmem %s1, 20
    %v94 = vld [vmem:[%s93] sm:$0x7]
    %v95 = vmul.f32 %v33, %v94
    %v96 = vadd.f32 %v88, %v95
    %v97 = vmul.f32 %v35, %v94
    %v98 = vadd.f32 %v90, %v97
    %s99 = scalar_lea.vmem %s1, 24
    %v100 = vld [vmem:[%s99] sm:$0x7]
    %v101 = vmul.f32 %v35, %v100
    %v102 = vadd.f32 %v96, %v101
    %s103 = scalar_lea.vmem %s1, 32
    %v104 = vld [vmem:[%s103] sm:$0x7]
    %v105 = vmul.f32 %v29, %v104
    %v106 = vmul.f32 %v37, %v104
    %v107 = vadd.f32 %v84, %v106
    %s108 = scalar_lea.vmem %s1, 36
    %v109 = vld [vmem:[%s108] sm:$0x7]
    %v110 = vmul.f32 %v29, %v109
    %v111 = vmul.f32 %v31, %v109
    %v112 = vadd.f32 %v105, %v111
    %v113 = vmul.f32 %v37, %v109
    %v114 = vadd.f32 %v92, %v113
    %v115 = vmul.f32 %v39, %v109
    %v116 = vadd.f32 %v107, %v115
    %s117 = scalar_lea.vmem %s1, 40
    %v118 = vld [vmem:[%s117] sm:$0x7]
    %v119 = vmul.f32 %v29, %v118
    %v120 = vmul.f32 %v31, %v118
    %v121 = vadd.f32 %v110, %v120
    %v122 = vmul.f32 %v33, %v118
    %v123 = vadd.f32 %v112, %v122
    %v124 = vmul.f32 %v37, %v118
    %v125 = vadd.f32 %v98, %v124
    %v126 = vmul.f32 %v39, %v118
    %v127 = vadd.f32 %v114, %v126
    %v128 = vmul.f32 %v41, %v118
    %v129 = vadd.f32 %v116, %v128
    %s130 = scalar_lea.vmem %s1, 44
    %v131 = vld [vmem:[%s130] sm:$0x7]
    %v132 = vmul.f32 %v29, %v131
    %v133 = vmul.f32 %v31, %v131
    %v134 = vadd.f32 %v119, %v133
    %v135 = vmul.f32 %v33, %v131
    %v136 = vadd.f32 %v121, %v135
    %v137 = vmul.f32 %v35, %v131
    %v138 = vadd.f32 %v123, %v137
    %v139 = vmul.f32 %v37, %v131
    %v140 = vadd.f32 %v102, %v139
    %v141 = vmul.f32 %v39, %v131
    %v142 = vadd.f32 %v125, %v141
    %v143 = vmul.f32 %v41, %v131
    %v144 = vadd.f32 %v127, %v143
    %v145 = vmul.f32 %v43, %v131
    %v146 = vadd.f32 %v129, %v145
    %s147 = scalar_lea.vmem %s1, 48
    %v148 = vld [vmem:[%s147] sm:$0x7]
    %v149 = vmul.f32 %v31, %v148
    %v150 = vadd.f32 %v132, %v149
    %v151 = vmul.f32 %v33, %v148
    %v152 = vadd.f32 %v134, %v151
    %v153 = vmul.f32 %v35, %v148
    %v154 = vadd.f32 %v136, %v153
    %v155 = vmul.f32 %v39, %v148
    %v156 = vadd.f32 %v140, %v155
    %v157 = vmul.f32 %v41, %v148
    %v158 = vadd.f32 %v142, %v157
    %v159 = vmul.f32 %v43, %v148
    %v160 = vadd.f32 %v144, %v159
    %s161 = scalar_lea.vmem %s1, 52
    %v162 = vld [vmem:[%s161] sm:$0x7]
    %v163 = vmul.f32 %v33, %v162
    %v164 = vadd.f32 %v150, %v163
    %v165 = vmul.f32 %v35, %v162
    %v166 = vadd.f32 %v152, %v165
    %v167 = vmul.f32 %v41, %v162
    %v168 = vadd.f32 %v156, %v167
    %v169 = vmul.f32 %v43, %v162
    %v170 = vadd.f32 %v158, %v169
    %s171 = scalar_lea.vmem %s1, 56
    %v172 = vld [vmem:[%s171] sm:$0x7]
    %v173 = vmul.f32 %v35, %v172
    %v174 = vadd.f32 %v164, %v173
    %v175 = vmul.f32 %v43, %v172
    %v176 = vadd.f32 %v168, %v175
    %s177 = scalar_lea.vmem %s1, 64
    %v178 = vld [vmem:[%s177] sm:$0x7]
    %v179 = vmul.f32 %v29, %v178
    %v180 = vmul.f32 %v37, %v178
    %v181 = vadd.f32 %v138, %v180
    %v182 = vmul.f32 %v45, %v178
    %v183 = vadd.f32 %v146, %v182
    %s184 = scalar_lea.vmem %s1, 68
    %v185 = vld [vmem:[%s184] sm:$0x7]
    %v186 = vmul.f32 %v29, %v185
    %v187 = vmul.f32 %v31, %v185
    %v188 = vadd.f32 %v179, %v187
    %v189 = vmul.f32 %v37, %v185
    %v190 = vadd.f32 %v154, %v189
    %v191 = vmul.f32 %v39, %v185
    %v192 = vadd.f32 %v181, %v191
    %v193 = vmul.f32 %v45, %v185
    %v194 = vadd.f32 %v160, %v193
    %v195 = vmul.f32 %v47, %v185
    %v196 = vadd.f32 %v183, %v195
    %s197 = scalar_lea.vmem %s1, 72
    %v198 = vld [vmem:[%s197] sm:$0x7]
    %v199 = vmul.f32 %v29, %v198
    %v200 = vmul.f32 %v31, %v198
    %v201 = vadd.f32 %v186, %v200
    %v202 = vmul.f32 %v33, %v198
    %v203 = vadd.f32 %v188, %v202
    %v204 = vmul.f32 %v37, %v198
    %v205 = vadd.f32 %v166, %v204
    %v206 = vmul.f32 %v39, %v198
    %v207 = vadd.f32 %v190, %v206
    %v208 = vmul.f32 %v41, %v198
    %v209 = vadd.f32 %v192, %v208
    %v210 = vmul.f32 %v45, %v198
    %v211 = vadd.f32 %v170, %v210
    %v212 = vmul.f32 %v47, %v198
    %v213 = vadd.f32 %v194, %v212
    %v214 = vmul.f32 %v49, %v198
    %v215 = vadd.f32 %v196, %v214
    %s216 = scalar_lea.vmem %s1, 76
    %v217 = vld [vmem:[%s216] sm:$0x7]
    %v218 = vmul.f32 %v29, %v217
    %v219 = vmul.f32 %v31, %v217
    %v220 = vadd.f32 %v199, %v219
    %v221 = vmul.f32 %v33, %v217
    %v222 = vadd.f32 %v201, %v221
    %v223 = vmul.f32 %v35, %v217
    %v224 = vadd.f32 %v203, %v223
    %v225 = vmul.f32 %v37, %v217
    %v226 = vadd.f32 %v174, %v225
    %v227 = vmul.f32 %v39, %v217
    %v228 = vadd.f32 %v205, %v227
    %v229 = vmul.f32 %v41, %v217
    %v230 = vadd.f32 %v207, %v229
    %v231 = vmul.f32 %v43, %v217
    %v232 = vadd.f32 %v209, %v231
    %v233 = vmul.f32 %v45, %v217
    %v234 = vadd.f32 %v176, %v233
    %v235 = vmul.f32 %v47, %v217
    %v236 = vadd.f32 %v211, %v235
    %v237 = vmul.f32 %v49, %v217
    %v238 = vadd.f32 %v213, %v237
    %v239 = vmul.f32 %v51, %v217
    %v240 = vadd.f32 %v215, %v239
    %s241 = scalar_lea.vmem %s1, 80
    %v242 = vld [vmem:[%s241] sm:$0x7]
    %v243 = vmul.f32 %v31, %v242
    %v244 = vadd.f32 %v218, %v243
    %v245 = vmul.f32 %v33, %v242
    %v246 = vadd.f32 %v220, %v245
    %v247 = vmul.f32 %v35, %v242
    %v248 = vadd.f32 %v222, %v247
    %v249 = vmul.f32 %v39, %v242
    %v250 = vadd.f32 %v226, %v249
    %v251 = vmul.f32 %v41, %v242
    %v252 = vadd.f32 %v228, %v251
    %v253 = vmul.f32 %v43, %v242
    %v254 = vadd.f32 %v230, %v253
    %v255 = vmul.f32 %v47, %v242
    %v256 = vadd.f32 %v234, %v255
    %v257 = vmul.f32 %v49, %v242
    %v258 = vadd.f32 %v236, %v257
    %v259 = vmul.f32 %v51, %v242
    %v260 = vadd.f32 %v238, %v259
    %s261 = scalar_lea.vmem %s1, 84
    %v262 = vld [vmem:[%s261] sm:$0x7]
    %v263 = vmul.f32 %v33, %v262
    %v264 = vadd.f32 %v244, %v263
    %v265 = vmul.f32 %v35, %v262
    %v266 = vadd.f32 %v246, %v265
    %v267 = vmul.f32 %v41, %v262
    %v268 = vadd.f32 %v250, %v267
    %v269 = vmul.f32 %v43, %v262
    %v270 = vadd.f32 %v252, %v269
    %v271 = vmul.f32 %v49, %v262
    %v272 = vadd.f32 %v256, %v271
    %v273 = vmul.f32 %v51, %v262
    %v274 = vadd.f32 %v258, %v273
    %s275 = scalar_lea.vmem %s1, 88
    %v276 = vld [vmem:[%s275] sm:$0x7]
    %v277 = vmul.f32 %v35, %v276
    %v278 = vadd.f32 %v264, %v277
    %v279 = vmul.f32 %v43, %v276
    %v280 = vadd.f32 %v268, %v279
    %v281 = vmul.f32 %v51, %v276
    %v282 = vadd.f32 %v272, %v281
    %s283 = scalar_lea.vmem %s1, 96
    %v284 = vld [vmem:[%s283] sm:$0x7]
    %v285 = vmul.f32 %v29, %v284
    %v286 = vmul.f32 %v37, %v284
    %v287 = vadd.f32 %v224, %v286
    %v288 = vmul.f32 %v45, %v284
    %v289 = vadd.f32 %v232, %v288
    %v290 = vmul.f32 %v53, %v284
    %v291 = vadd.f32 %v240, %v290
    %s292 = scalar_lea.vmem %s1, 100
    %v293 = vld [vmem:[%s292] sm:$0x7]
    %v294 = vmul.f32 %v29, %v293
    %v295 = vmul.f32 %v31, %v293
    %v296 = vadd.f32 %v285, %v295
    %v297 = vmul.f32 %v37, %v293
    %v298 = vadd.f32 %v248, %v297
    %v299 = vmul.f32 %v39, %v293
    %v300 = vadd.f32 %v287, %v299
    %v301 = vmul.f32 %v45, %v293
    %v302 = vadd.f32 %v254, %v301
    %v303 = vmul.f32 %v47, %v293
    %v304 = vadd.f32 %v289, %v303
    %v305 = vmul.f32 %v53, %v293
    %v306 = vadd.f32 %v260, %v305
    %v307 = vmul.f32 %v55, %v293
    %v308 = vadd.f32 %v291, %v307
    %s309 = scalar_lea.vmem %s1, 104
    %v310 = vld [vmem:[%s309] sm:$0x7]
    %v311 = vmul.f32 %v29, %v310
    %v312 = vmul.f32 %v31, %v310
    %v313 = vadd.f32 %v294, %v312
    %v314 = vmul.f32 %v33, %v310
    %v315 = vadd.f32 %v296, %v314
    %v316 = vmul.f32 %v37, %v310
    %v317 = vadd.f32 %v266, %v316
    %v318 = vmul.f32 %v39, %v310
    %v319 = vadd.f32 %v298, %v318
    %v320 = vmul.f32 %v41, %v310
    %v321 = vadd.f32 %v300, %v320
    %v322 = vmul.f32 %v45, %v310
    %v323 = vadd.f32 %v270, %v322
    %v324 = vmul.f32 %v47, %v310
    %v325 = vadd.f32 %v302, %v324
    %v326 = vmul.f32 %v49, %v310
    %v327 = vadd.f32 %v304, %v326
    %v328 = vmul.f32 %v53, %v310
    %v329 = vadd.f32 %v274, %v328
    %v330 = vmul.f32 %v55, %v310
    %v331 = vadd.f32 %v306, %v330
    %v332 = vmul.f32 %v57, %v310
    %v333 = vadd.f32 %v308, %v332
    %s334 = scalar_lea.vmem %s1, 108
    %v335 = vld [vmem:[%s334] sm:$0x7]
    %v336 = vmul.f32 %v29, %v335
    %v337 = vmul.f32 %v31, %v335
    %v338 = vadd.f32 %v311, %v337
    %v339 = vmul.f32 %v33, %v335
    %v340 = vadd.f32 %v313, %v339
    %v341 = vmul.f32 %v35, %v335
    %v342 = vadd.f32 %v315, %v341
    %v343 = vmul.f32 %v37, %v335
    %v344 = vadd.f32 %v278, %v343
    %v345 = vmul.f32 %v39, %v335
    %v346 = vadd.f32 %v317, %v345
    %v347 = vmul.f32 %v41, %v335
    %v348 = vadd.f32 %v319, %v347
    %v349 = vmul.f32 %v43, %v335
    %v350 = vadd.f32 %v321, %v349
    %v351 = vmul.f32 %v45, %v335
    %v352 = vadd.f32 %v280, %v351
    %v353 = vmul.f32 %v47, %v335
    %v354 = vadd.f32 %v323, %v353
    %v355 = vmul.f32 %v49, %v335
    %v356 = vadd.f32 %v325, %v355
    %v357 = vmul.f32 %v51, %v335
    %v358 = vadd.f32 %v327, %v357
    %v359 = vmul.f32 %v53, %v335
    %v360 = vadd.f32 %v282, %v359
    %v361 = vmul.f32 %v55, %v335
    %v362 = vadd.f32 %v329, %v361
    %v363 = vmul.f32 %v57, %v335
    %v364 = vadd.f32 %v331, %v363
    %v365 = vmul.f32 %v59, %v335
    %v366 = vadd.f32 %v333, %v365
    %s367 = scalar_lea.vmem %s1, 112
    %v368 = vld [vmem:[%s367] sm:$0x7]
    %v369 = vmul.f32 %v31, %v368
    %v370 = vadd.f32 %v336, %v369
    %v371 = vmul.f32 %v33, %v368
    %v372 = vadd.f32 %v338, %v371
    %v373 = vmul.f32 %v35, %v368
    %v374 = vadd.f32 %v340, %v373
    %v375 = vmul.f32 %v39, %v368
    %v376 = vadd.f32 %v344, %v375
    %v377 = vmul.f32 %v41, %v368
    %v378 = vadd.f32 %v346, %v377
    %v379 = vmul.f32 %v43, %v368
    %v380 = vadd.f32 %v348, %v379
    %v381 = vmul.f32 %v47, %v368
    %v382 = vadd.f32 %v352, %v381
    %v383 = vmul.f32 %v49, %v368
    %v384 = vadd.f32 %v354, %v383
    %v385 = vmul.f32 %v51, %v368
    %v386 = vadd.f32 %v356, %v385
    %v387 = vmul.f32 %v55, %v368
    %v388 = vadd.f32 %v360, %v387
    %v389 = vmul.f32 %v57, %v368
    %v390 = vadd.f32 %v362, %v389
    %v391 = vmul.f32 %v59, %v368
    %v392 = vadd.f32 %v364, %v391
    %s393 = scalar_lea.vmem %s1, 116
    %v394 = vld [vmem:[%s393] sm:$0x7]
    %v395 = vmul.f32 %v33, %v394
    %v396 = vadd.f32 %v370, %v395
    %v397 = vmul.f32 %v35, %v394
    %v398 = vadd.f32 %v372, %v397
    %v399 = vmul.f32 %v41, %v394
    %v400 = vadd.f32 %v376, %v399
    %v401 = vmul.f32 %v43, %v394
    %v402 = vadd.f32 %v378, %v401
    %v403 = vmul.f32 %v49, %v394
    %v404 = vadd.f32 %v382, %v403
    %v405 = vmul.f32 %v51, %v394
    %v406 = vadd.f32 %v384, %v405
    %v407 = vmul.f32 %v57, %v394
    %v408 = vadd.f32 %v388, %v407
    %v409 = vmul.f32 %v59, %v394
    %v410 = vadd.f32 %v390, %v409
    %s411 = scalar_lea.vmem %s1, 120
    %v412 = vld [vmem:[%s411] sm:$0x7]
    %v413 = vmul.f32 %v35, %v412
    %v414 = vadd.f32 %v396, %v413
    %v415 = vmul.f32 %v43, %v412
    %v416 = vadd.f32 %v400, %v415
    %v417 = vmul.f32 %v51, %v412
    %v418 = vadd.f32 %v404, %v417
    %v419 = vmul.f32 %v59, %v412
    %v420 = vadd.f32 %v408, %v419
    %s421 = scalar_lea.vmem %s1, 128
    %v422 = vld [vmem:[%s421] sm:$0x7]
    %v423 = vmul.f32 %v37, %v422
    %v424 = vadd.f32 %v342, %v423
    %v425 = vmul.f32 %v45, %v422
    %v426 = vadd.f32 %v350, %v425
    %v427 = vmul.f32 %v53, %v422
    %v428 = vadd.f32 %v358, %v427
    %s429 = scalar_lea.vmem %s1, 132
    %v430 = vld [vmem:[%s429] sm:$0x7]
    %v431 = vmul.f32 %v37, %v430
    %v432 = vadd.f32 %v374, %v431
    %v433 = vmul.f32 %v39, %v430
    %v434 = vadd.f32 %v424, %v433
    %v435 = vmul.f32 %v45, %v430
    %v436 = vadd.f32 %v380, %v435
    %v437 = vmul.f32 %v47, %v430
    %v438 = vadd.f32 %v426, %v437
    %v439 = vmul.f32 %v53, %v430
    %v440 = vadd.f32 %v386, %v439
    %v441 = vmul.f32 %v55, %v430
    %v442 = vadd.f32 %v428, %v441
    %s443 = scalar_lea.vmem %s1, 136
    %v444 = vld [vmem:[%s443] sm:$0x7]
    %v445 = vmul.f32 %v37, %v444
    %v446 = vadd.f32 %v398, %v445
    %v447 = vmul.f32 %v39, %v444
    %v448 = vadd.f32 %v432, %v447
    %v449 = vmul.f32 %v41, %v444
    %v450 = vadd.f32 %v434, %v449
    %v451 = vmul.f32 %v45, %v444
    %v452 = vadd.f32 %v402, %v451
    %v453 = vmul.f32 %v47, %v444
    %v454 = vadd.f32 %v436, %v453
    %v455 = vmul.f32 %v49, %v444
    %v456 = vadd.f32 %v438, %v455
    %v457 = vmul.f32 %v53, %v444
    %v458 = vadd.f32 %v406, %v457
    %v459 = vmul.f32 %v55, %v444
    %v460 = vadd.f32 %v440, %v459
    %v461 = vmul.f32 %v57, %v444
    %v462 = vadd.f32 %v442, %v461
    %s463 = scalar_lea.vmem %s1, 140
    %v464 = vld [vmem:[%s463] sm:$0x7]
    %v465 = vmul.f32 %v37, %v464
    %v466 = vadd.f32 %v414, %v465
    %v467 = vmul.f32 %v39, %v464
    %v468 = vadd.f32 %v446, %v467
    %v469 = vmul.f32 %v41, %v464
    %v470 = vadd.f32 %v448, %v469
    %v471 = vmul.f32 %v43, %v464
    %v472 = vadd.f32 %v450, %v471
    %v473 = vmul.f32 %v45, %v464
    %v474 = vadd.f32 %v416, %v473
    %v475 = vmul.f32 %v47, %v464
    %v476 = vadd.f32 %v452, %v475
    %v477 = vmul.f32 %v49, %v464
    %v478 = vadd.f32 %v454, %v477
    %v479 = vmul.f32 %v51, %v464
    %v480 = vadd.f32 %v456, %v479
    %v481 = vmul.f32 %v53, %v464
    %v482 = vadd.f32 %v418, %v481
    %v483 = vmul.f32 %v55, %v464
    %v484 = vadd.f32 %v458, %v483
    %v485 = vmul.f32 %v57, %v464
    %v486 = vadd.f32 %v460, %v485
    %v487 = vmul.f32 %v59, %v464
    %v488 = vadd.f32 %v462, %v487
    %s489 = scalar_lea.vmem %s1, 144
    %v490 = vld [vmem:[%s489] sm:$0x7]
    %v491 = vmul.f32 %v39, %v490
    %v492 = vadd.f32 %v466, %v491
    %v493 = vmul.f32 %v41, %v490
    %v494 = vadd.f32 %v468, %v493
    %v495 = vmul.f32 %v43, %v490
    %v496 = vadd.f32 %v470, %v495
    %v497 = vmul.f32 %v47, %v490
    %v498 = vadd.f32 %v474, %v497
    %v499 = vmul.f32 %v49, %v490
    %v500 = vadd.f32 %v476, %v499
    %v501 = vmul.f32 %v51, %v490
    %v502 = vadd.f32 %v478, %v501
    %v503 = vmul.f32 %v55, %v490
    %v504 = vadd.f32 %v482, %v503
    %v505 = vmul.f32 %v57, %v490
    %v506 = vadd.f32 %v484, %v505
    %v507 = vmul.f32 %v59, %v490
    %v508 = vadd.f32 %v486, %v507
    %s509 = scalar_lea.vmem %s1, 148
    %v510 = vld [vmem:[%s509] sm:$0x7]
    %v511 = vmul.f32 %v41, %v510
    %v512 = vadd.f32 %v492, %v511
    %v513 = vmul.f32 %v43, %v510
    %v514 = vadd.f32 %v494, %v513
    %v515 = vmul.f32 %v49, %v510
    %v516 = vadd.f32 %v498, %v515
    %v517 = vmul.f32 %v51, %v510
    %v518 = vadd.f32 %v500, %v517
    %v519 = vmul.f32 %v57, %v510
    %v520 = vadd.f32 %v504, %v519
    %v521 = vmul.f32 %v59, %v510
    %v522 = vadd.f32 %v506, %v521
    %s523 = scalar_lea.vmem %s1, 152
    %v524 = vld [vmem:[%s523] sm:$0x7]
    %v525 = vmul.f32 %v43, %v524
    %v526 = vadd.f32 %v512, %v525
    %v527 = vmul.f32 %v51, %v524
    %v528 = vadd.f32 %v516, %v527
    %v529 = vmul.f32 %v59, %v524
    %v530 = vadd.f32 %v520, %v529
    %s531 = scalar_lea.vmem %s1, 160
    %v532 = vld [vmem:[%s531] sm:$0x7]
    %v533 = vmul.f32 %v45, %v532
    %v534 = vadd.f32 %v472, %v533
    %v535 = vmul.f32 %v53, %v532
    %v536 = vadd.f32 %v480, %v535
    %s537 = scalar_lea.vmem %s1, 164
    %v538 = vld [vmem:[%s537] sm:$0x7]
    %v539 = vmul.f32 %v45, %v538
    %v540 = vadd.f32 %v496, %v539
    %v541 = vmul.f32 %v47, %v538
    %v542 = vadd.f32 %v534, %v541
    %v543 = vmul.f32 %v53, %v538
    %v544 = vadd.f32 %v502, %v543
    %v545 = vmul.f32 %v55, %v538
    %v546 = vadd.f32 %v536, %v545
    %s547 = scalar_lea.vmem %s1, 168
    %v548 = vld [vmem:[%s547] sm:$0x7]
    %v549 = vmul.f32 %v45, %v548
    %v550 = vadd.f32 %v514, %v549
    %v551 = vmul.f32 %v47, %v548
    %v552 = vadd.f32 %v540, %v551
    %v553 = vmul.f32 %v49, %v548
    %v554 = vadd.f32 %v542, %v553
    %v555 = vmul.f32 %v53, %v548
    %v556 = vadd.f32 %v518, %v555
    %v557 = vmul.f32 %v55, %v548
    %v558 = vadd.f32 %v544, %v557
    %v559 = vmul.f32 %v57, %v548
    %v560 = vadd.f32 %v546, %v559
    %s561 = scalar_lea.vmem %s1, 172
    %v562 = vld [vmem:[%s561] sm:$0x7]
    %v563 = vmul.f32 %v45, %v562
    %v564 = vadd.f32 %v526, %v563
    %v565 = vmul.f32 %v47, %v562
    %v566 = vadd.f32 %v550, %v565
    %v567 = vmul.f32 %v49, %v562
    %v568 = vadd.f32 %v552, %v567
    %v569 = vmul.f32 %v51, %v562
    %v570 = vadd.f32 %v554, %v569
    %v571 = vmul.f32 %v53, %v562
    %v572 = vadd.f32 %v528, %v571
    %v573 = vmul.f32 %v55, %v562
    %v574 = vadd.f32 %v556, %v573
    %v575 = vmul.f32 %v57, %v562
    %v576 = vadd.f32 %v558, %v575
    %v577 = vmul.f32 %v59, %v562
    %v578 = vadd.f32 %v560, %v577
    %s579 = scalar_lea.vmem %s1, 176
    %v580 = vld [vmem:[%s579] sm:$0x7]
    %v581 = vmul.f32 %v47, %v580
    %v582 = vadd.f32 %v564, %v581
    %v583 = vmul.f32 %v49, %v580
    %v584 = vadd.f32 %v566, %v583
    %v585 = vmul.f32 %v51, %v580
    %v586 = vadd.f32 %v568, %v585
    %v587 = vmul.f32 %v55, %v580
    %v588 = vadd.f32 %v572, %v587
    %v589 = vmul.f32 %v57, %v580
    %v590 = vadd.f32 %v574, %v589
    %v591 = vmul.f32 %v59, %v580
    %v592 = vadd.f32 %v576, %v591
    %s593 = scalar_lea.vmem %s1, 180
    %v594 = vld [vmem:[%s593] sm:$0x7]
    %v595 = vmul.f32 %v49, %v594
    %v596 = vadd.f32 %v582, %v595
    %v597 = vmul.f32 %v51, %v594
    %v598 = vadd.f32 %v584, %v597
    %v599 = vmul.f32 %v57, %v594
    %v600 = vadd.f32 %v588, %v599
    %v601 = vmul.f32 %v59, %v594
    %v602 = vadd.f32 %v590, %v601
    %s603 = scalar_lea.vmem %s1, 184
    %v604 = vld [vmem:[%s603] sm:$0x7]
    %v605 = vmul.f32 %v51, %v604
    %v606 = vadd.f32 %v596, %v605
    %v607 = vmul.f32 %v59, %v604
    %v608 = vadd.f32 %v600, %v607
    %s609 = scalar_lea.vmem %s1, 192
    %v610 = vld [vmem:[%s609] sm:$0x7]
    %v611 = vmul.f32 %v53, %v610
    %v612 = vadd.f32 %v570, %v611
    %s613 = scalar_lea.vmem %s1, 196
    %v614 = vld [vmem:[%s613] sm:$0x7]
    %v615 = vmul.f32 %v53, %v614
    %v616 = vadd.f32 %v586, %v615
    %v617 = vmul.f32 %v55, %v614
    %v618 = vadd.f32 %v612, %v617
    %s619 = scalar_lea.vmem %s1, 200
    %v620 = vld [vmem:[%s619] sm:$0x7]
    %v621 = vmul.f32 %v53, %v620
    %v622 = vadd.f32 %v598, %v621
    %v623 = vmul.f32 %v55, %v620
    %v624 = vadd.f32 %v616, %v623
    %v625 = vmul.f32 %v57, %v620
    %v626 = vadd.f32 %v618, %v625
    %s627 = scalar_lea.vmem %s1, 204
    %v628 = vld [vmem:[%s627] sm:$0x7]
    %v629 = vmul.f32 %v53, %v628
    %v630 = vadd.f32 %v606, %v629
    %v631 = vmul.f32 %v55, %v628
    %v632 = vadd.f32 %v622, %v631
    %v633 = vmul.f32 %v57, %v628
    %v634 = vadd.f32 %v624, %v633
    %v635 = vmul.f32 %v59, %v628
    %v636 = vadd.f32 %v626, %v635
    %s637 = scalar_lea.vmem %s1, 208
    %v638 = vld [vmem:[%s637] sm:$0x7]
    %v639 = vmul.f32 %v55, %v638
    %v640 = vadd.f32 %v630, %v639
    %v641 = vmul.f32 %v57, %v638
    %v642 = vadd.f32 %v632, %v641
    %v643 = vmul.f32 %v59, %v638
    %v644 = vadd.f32 %v634, %v643
    %s645 = scalar_lea.vmem %s1, 212
    %v646 = vld [vmem:[%s645] sm:$0x7]
    %v647 = vmul.f32 %v57, %v646
    %v648 = vadd.f32 %v640, %v647
    %v649 = vmul.f32 %v59, %v646
    %v650 = vadd.f32 %v642, %v649
    %s651 = scalar_lea.vmem %s1, 216
    %v652 = vld [vmem:[%s651] sm:$0x7]
    %v653 = vmul.f32 %v59, %v652
    %v654 = vadd.f32 %v648, %v653
    %v655 = vmax.f32 %v366, %v392
    %v656 = vmax.f32 %v655, %v410
    %v657 = vmax.f32 %v656, %v420
    %v658 = vmax.f32 %v657, %v488
    %v659 = vmax.f32 %v658, %v508
    %v660 = vmax.f32 %v659, %v522
    %v661 = vmax.f32 %v660, %v530
    %v662 = vmax.f32 %v661, %v578
    %v663 = vmax.f32 %v662, %v592
    %v664 = vmax.f32 %v663, %v602
    %v665 = vmax.f32 %v664, %v608
    %v666 = vmax.f32 %v665, %v636
    %v667 = vmax.f32 %v666, %v644
    %v668 = vmax.f32 %v667, %v650
    %v669 = vmax.f32 %v668, %v654
    %v670 = vstv %s60
    %v671 = vadd.f32 %v669, %v670
    %v672 = vmax.f32 %v671, 0.0
    %v673 = vld [vmem:[%s2] sm:$0xff]
    %v674 = vld [vmem:[%s2 + $0x8] sm:$0xff]
    %v675 = vld [vmem:[%s2 + $0x10] sm:$0xff]
    %v676 = vld [vmem:[%s2 + $0x18] sm:$0xff]
    %v677 = vld [vmem:[%s2 + $0x20] sm:$0xff]
    %v678 = vld [vmem:[%s2 + $0x28] sm:$0xff]
    %v679 = vld [vmem:[%s2 + $0x30] sm:$0xff]
    %v680 = vld [vmem:[%s2 + $0x38] sm:$0xff]
    %v681 = vld [vmem:[%s2 + $0x40] sm:$0xff]
    %v682 = vld [vmem:[%s2 + $0x48] sm:$0xff]
    %v683 = vld [vmem:[%s2 + $0x50] sm:$0xff]
    %v684 = vld [vmem:[%s2 + $0x58] sm:$0xff]
    %v685 = vld [vmem:[%s2 + $0x60] sm:$0xff]
    %v686 = vld [vmem:[%s2 + $0x68] sm:$0xf]
    %v687 = vld [vmem:[%s2 + $0x70] sm:$0xff]
    %v688 = vld [vmem:[%s2 + $0x78] sm:$0xff]
    %v689 = vld [vmem:[%s2 + $0x80] sm:$0xff]
    %v690 = vld [vmem:[%s2 + $0x88] sm:$0xff]
    %v691 = vld [vmem:[%s2 + $0x90] sm:$0xff]
    %v692 = vld [vmem:[%s2 + $0x98] sm:$0xff]
    %v693 = vld [vmem:[%s2 + $0xa0] sm:$0xff]
    %v694 = vld [vmem:[%s2 + $0xa8] sm:$0xff]
    %v695 = vld [vmem:[%s2 + $0xb0] sm:$0xff]
    %v696 = vld [vmem:[%s2 + $0xb8] sm:$0xff]
    %v697 = vld [vmem:[%s2 + $0xc0] sm:$0xff]
    %v698 = vld [vmem:[%s2 + $0xc8] sm:$0xff]
    %v699 = vld [vmem:[%s2 + $0xd0] sm:$0xff]
    %v700 = vld [vmem:[%s2 + $0xd8] sm:$0xf]
    %v702 = vrot.slane %v672, 1
    %vm703 = vcmask 883712
    %v704 = vsel %vm703, %v702, 0
    %vm706 = vcmask 1043456
    %v708 = vsel %vm706, %v700, 0
    %710 = vmatpush.msra.mxu0 0.0
    %711 = vmatpush.msra.mxu0 0.0
    %712 = vmatpush.msra.mxu0 %v708
    %713 = vmatpush.msra.mxu0 %v699
    %714 = vmatpush.msra.mxu0 %v698
    %715 = vmatpush.msra.mxu0 %v697
    %716 = vmatpush.msra.mxu0 %v696
    %717 = vmatpush.msra.mxu0 %v695
    %718 = vmatpush.msra.mxu0 %v694
    %719 = vmatpush.msra.mxu0 %v693
    %720 = vmatpush.msra.mxu0 %v692
    %721 = vmatpush.msra.mxu0 %v691
    %722 = vmatpush.msra.mxu0 %v690
    %723 = vmatpush.msra.mxu0 %v689
    %724 = vmatpush.msra.mxu0 %v688
    %725 = vmatpush.msra.mxu0 %v687
    %726 = vmatmul.f32.gmra.mxu0 %v704
    %v727 = vpop.f32.mrf.mxu0
    %v728 = vadd.f32 0.0, %v727
    %729 = vdwg.mxu0
    %v730 = vld [vmem:[%s2 + $0xe0] sm:$0xff]
    %v731 = vld [vmem:[%s2 + $0xe8] sm:$0xff]
    %v732 = vld [vmem:[%s2 + $0xf0] sm:$0xff]
    %v733 = vld [vmem:[%s2 + $0xf8] sm:$0xff]
    %v734 = vld [vmem:[%s2 + $0x100] sm:$0xff]
    %v735 = vld [vmem:[%s2 + $0x108] sm:$0xff]
    %v736 = vld [vmem:[%s2 + $0x110] sm:$0xff]
    %v737 = vld [vmem:[%s2 + $0x118] sm:$0xff]
    %v738 = vld [vmem:[%s2 + $0x120] sm:$0xff]
    %v739 = vld [vmem:[%s2 + $0x128] sm:$0xff]
    %v740 = vld [vmem:[%s2 + $0x130] sm:$0xff]
    %v741 = vld [vmem:[%s2 + $0x138] sm:$0xff]
    %v742 = vld [vmem:[%s2 + $0x140] sm:$0xff]
    %v743 = vld [vmem:[%s2 + $0x148] sm:$0xf]
    %v744 = vrot.slane %v672, 2
    %v745 = vsel %vm703, %v744, 0
    %v748 = vsel %vm706, %v743, 0
    %750 = vmatpush.msra.mxu0 0.0
    %751 = vmatpush.msra.mxu0 0.0
    %752 = vmatpush.msra.mxu0 %v748
    %753 = vmatpush.msra.mxu0 %v742
    %754 = vmatpush.msra.mxu0 %v741
    %755 = vmatpush.msra.mxu0 %v740
    %756 = vmatpush.msra.mxu0 %v739
    %757 = vmatpush.msra.mxu0 %v738
    %758 = vmatpush.msra.mxu0 %v737
    %759 = vmatpush.msra.mxu0 %v736
    %760 = vmatpush.msra.mxu0 %v735
    %761 = vmatpush.msra.mxu0 %v734
    %762 = vmatpush.msra.mxu0 %v733
    %763 = vmatpush.msra.mxu0 %v732
    %764 = vmatpush.msra.mxu0 %v731
    %765 = vmatpush.msra.mxu0 %v730
    %766 = vmatmul.f32.gmra.mxu0 %v745
    %v767 = vpop.f32.mrf.mxu0
    %v768 = vadd.f32 0.0, %v767
    %769 = vdwg.mxu0
    %v770 = vld [vmem:[%s2 + $0x150] sm:$0x1]
    %v771 = vsel %vm703, %v672, 0
    %v774 = vsel %vm706, %v686, 0
    %776 = vmatpush.msra.mxu0 0.0
    %777 = vmatpush.msra.mxu0 0.0
    %778 = vmatpush.msra.mxu0 %v774
    %779 = vmatpush.msra.mxu0 %v685
    %780 = vmatpush.msra.mxu0 %v684
    %781 = vmatpush.msra.mxu0 %v683
    %782 = vmatpush.msra.mxu0 %v682
    %783 = vmatpush.msra.mxu0 %v681
    %784 = vmatpush.msra.mxu0 %v680
    %785 = vmatpush.msra.mxu0 %v679
    %786 = vmatpush.msra.mxu0 %v678
    %787 = vmatpush.msra.mxu0 %v677
    %788 = vmatpush.msra.mxu0 %v676
    %789 = vmatpush.msra.mxu0 %v675
    %790 = vmatpush.msra.mxu0 %v674
    %791 = vmatpush.msra.mxu0 %v673
    %792 = vmatmul.f32.gmra.mxu0 %v771
    %v793 = vpop.f32.mrf.mxu0
    %v794 = vadd.f32 %v728, %v793
    %795 = vdwg.mxu0
    %v796 = vadd.f32 %v770, %v794
    %v797 = vadd.f32 %v796, %v768
    %v798 = vmax.f32 %v797, 0.0
    %v799 = vld [vmem:[%s2 + $0x158] sm:$0xff]
    %v800 = vld [vmem:[%s2 + $0x160] sm:$0xff]
    %v801 = vperm.slane %v798, 0
    %v802 = vmul.f32 %v801, %v799
    %vm803 = vcmask 523264
    %v804 = vsel %vm803, %v802, 0.0
    %805 = vadd.xlane.f32.xlu0 %v804
    %v806 = vpop.xlane.xlu0 %805
    %v807 = vadd.f32 %v806, %v800
    %v808 = vmax.f32 %v807, 0.0
    %v809 = vld [vmem:[%s2 + $0x168] sm:$0xff]
    %v810 = vmul.f32 %v808, %v809
    %vm811 = vcmask 7168
    %v812 = vsel %vm811, %v810, 0.0
    %v813 = vrot.slane %v812, 4
    %v814 = vadd.f32 %v812, %v813
    %v815 = vrot.slane %v814, 2
    %v816 = vadd.f32 %v814, %v815
    %v817 = vrot.slane %v816, 1
    %v818 = vadd.f32 %v816, %v817
    %v819 = vstv %s61
    %v820 = vadd.f32 %v818, %v819
    %v821 = vmax.f32 %v820, 0.0
    %vm822 = vcmask 0
    %823 = vst.msk [vmem:[#allocation5] sm:$0x1] %vm822, %v821
    // Predicated region
    $region18: #{dsmodel0_forward.1} parent=1 // pred_check
      _
    $region19: #{dsmodel0_forward.1} parent=1 // pred_check_branch
      %825 = sbr.rel (0) target = $region21
    $region20: #{dsmodel0_forward.1} parent=1 // pred_region
      %827 = vsyncadd [#allocation3], 0
      %s829 = sshll.u32 [#allocation5], 4
      %s830 = int_to_ptr.vmem [resolvable:$true] %s829
      %s831 = sshll.u32 %s3, 4
      %s832 = int_to_ptr.hbm [resolvable:$true] %s831
      %834 = dma.vmem_to_hbm [thread:$0]  %s830, 16, %s832, [#allocation3]
    $region21: #{dsmodel0_forward.1} parent=1 // pred_fallthru
      _
    // Predicated region
    $region22: #{dsmodel0_forward.1} parent=1 // pred_check
      _
    $region23: #{dsmodel0_forward.1} parent=1 // pred_check_branch
      %836 = sbr.rel (0) target = $region25
    $region24: #{dsmodel0_forward.1} parent=1 // pred_region
      %838 = dma.done [#allocation3], 16
    $region25: #{dsmodel0_forward.1} parent=1 // pred_fallthru
      _
    %839 = vsyncpa [#allocation3], 1
    %840 = vsyncpa [#allocation4], 1

</llo_original>
